<compile_context>
chip_gen: v7x
topology: tpu7x:2x2x1
jax: 0.10.0
libtpu: 0.0.40
codegen_flags: <defaults>
</compile_context>

<pallas_src>
import math
from functools import partial

import jax
import jax.numpy as jnp
from jax.experimental import pallas as pl
from jax.experimental.pallas import tpu as pltpu


# ---------------------------------------------------------------------------
# Pass 1: fused QKV projection (runs once per token).
# ---------------------------------------------------------------------------
def _qkv_projection_kernel(x_ref, wq_ref, wk_ref, wv_ref,      # inputs
                           q_ref, kt_ref, v_ref,               # outputs
                           *, num_heads, head_dim):
  H, D = num_heads, head_dim
  x = x_ref[0]                                                      # (Ts, C) bf16
  ts = x.shape[0]
  # Three wide MXU matmuls; scale 1/sqrt(D) already folded into W_q.
  q = jnp.dot(x, wq_ref[...], preferred_element_type=jnp.float32)  # (Ts, H*D)
  k = jnp.dot(x, wk_ref[...], preferred_element_type=jnp.float32)
  v = jnp.dot(x, wv_ref[...], preferred_element_type=jnp.float32)
  # Head-major relayout happens exactly once per token (not per q-tile).
  q_ref[0] = jnp.transpose(q.reshape(ts, H, D), (1, 0, 2)).astype(q_ref.dtype)
  kt_ref[0] = jnp.transpose(k.reshape(ts, H, D), (1, 2, 0)).astype(kt_ref.dtype)
  v_ref[0] = jnp.transpose(v.reshape(ts, H, D), (1, 0, 2)).astype(v_ref.dtype)


# ---------------------------------------------------------------------------
# Pass 2: flash attention over pre-projected Q / K^T / V + fused out-proj.
# ---------------------------------------------------------------------------
def _flash_attention_kernel(q_ref, kt_ref, v_ref, wo_ref, bo_ref,  # inputs
                            o_ref,                                 # output
                            m_acc, l_acc, o_acc,                   # scratch
                            *, num_heads, head_dim):
  H, D = num_heads, head_dim
  j = pl.program_id(2)

  @pl.when(j == 0)
  def _init():
    m_acc[...] = jnp.full_like(m_acc, -jnp.inf)
    l_acc[...] = jnp.zeros_like(l_acc)
    o_acc[...] = jnp.zeros_like(o_acc)

  q = q_ref[0]        # (H, Tq, D) bf16, already scaled by 1/sqrt(D)
  kt = kt_ref[0]      # (H, D, Tk) bf16, pre-transposed -> no hidden transpose
  v = v_ref[0]        # (H, Tk, D) bf16

  # Batched-over-heads logits + online softmax (softmax math in f32).
  s = jnp.einsum('hqd,hdk->hqk', q, kt,
                 preferred_element_type=jnp.float32)                # (H, Tq, Tk)
  m_prev = m_acc[...]
  m_new = jnp.maximum(m_prev, jnp.max(s, axis=-1, keepdims=True))
  alpha = jnp.exp(m_prev - m_new)
  p = jnp.exp(s - m_new)
  l_acc[...] = alpha * l_acc[...] + jnp.sum(p, axis=-1, keepdims=True)
  o_acc[...] = alpha * o_acc[...] + jnp.einsum(
      'hqk,hkd->hqd', p.astype(v.dtype), v, preferred_element_type=jnp.float32)
  m_acc[...] = m_new

  @pl.when(j == pl.num_programs(2) - 1)
  def _finalize():
    attn = o_acc[...] * pl.reciprocal(l_acc[...], approx=True)      # (H, Tq, D)
    tq = attn.shape[1]
    attn2 = jnp.transpose(attn, (1, 0, 2)).reshape(tq, H * D)       # (Tq, H*D)
    out = jnp.dot(attn2.astype(jnp.bfloat16), wo_ref[...],
                  preferred_element_type=jnp.float32) + bo_ref[...]
    o_ref[0] = out.astype(o_ref.dtype)


# ---------------------------------------------------------------------------
# Parameter preparation (torch layout -> kernel layout), one-time.
# ---------------------------------------------------------------------------
def prepare_params(w_qkv, w_proj, b_proj, *, num_heads, head_dim,
                   compute_dtype=jnp.bfloat16):
  """w_qkv: (C, 3*H*D) columns laid out like torch's view(..., H, 3*D).chunk(3).
  w_proj: (H*D, C); b_proj: (C,).  Returns head-major per-role slabs with
  1/sqrt(D) folded into W_q (bf16) plus the f32 projection bias as (1, C)."""
  C = w_qkv.shape[0]
  H, D = num_heads, head_dim
  w3 = w_qkv.reshape(C, H, 3, D)                    # [c, h, {q,k,v}, d]
  scale = 1.0 / math.sqrt(D)
  w_q = (w3[:, :, 0, :] * scale).reshape(C, H * D).astype(compute_dtype)
  w_k = w3[:, :, 1, :].reshape(C, H * D).astype(compute_dtype)
  w_v = w3[:, :, 2, :].reshape(C, H * D).astype(compute_dtype)
  w_o = w_proj.astype(compute_dtype)
  b_o = jnp.asarray(b_proj, jnp.float32).reshape(1, -1)
  return w_q, w_k, w_v, w_o, b_o


def _pick_tile(s, target, align):
  """Largest tile <= target that divides s and is a multiple of `align`,
  else s itself (full extent, which always satisfies the layout rules)."""
  if s <= target:
    return s
  for t in range(min(target, s), 0, -1):
    if s % t == 0 and t % align == 0:
      return t
  return s  # NOTE: falls back to a single full-S tile; fine for moderate S.


def _vmem_limit_bytes():
  """Re-derive the VMEM budget per chip generation (64 MiB/TC on v7x,
  128 MiB on v5e/v6e)."""
  try:
    cap = pltpu.get_tpu_info().vmem_capacity_bytes
  except Exception:
    cap = 64 * 1024 * 1024
  return min(int(cap * 0.65), 96 * 1024 * 1024)


# ---------------------------------------------------------------------------
# Public wrapper: full SelfAttention forward.
# ---------------------------------------------------------------------------
def self_attention(x, params, *, num_heads, head_dim,
                   q_tile=256, kv_tile=256, proj_tile=512):
  w_q, w_k, w_v, w_o, b_o = params
  B, S, C = x.shape
  H, D = num_heads, head_dim
  HD = H * D
  vmem_limit = _vmem_limit_bytes()

  # Stream activations at bf16 (halves HBM traffic of the streamed x tiles).
  xb = x.astype(jnp.bfloat16)

  # ---- Pass 1: QKV projection, once per token ----------------------------
  Ts = _pick_tile(S, proj_tile, 128)
  proj_kernel = partial(_qkv_projection_kernel, num_heads=H, head_dim=D)
  q, kt, v = pl.pallas_call(
      proj_kernel,
      out_shape=(
          jax.ShapeDtypeStruct((B, H, S, D), jnp.bfloat16),   # Q  (scaled)
          jax.ShapeDtypeStruct((B, H, D, S), jnp.bfloat16),   # K^T
          jax.ShapeDtypeStruct((B, H, S, D), jnp.bfloat16),   # V
      ),
      grid_spec=pltpu.PrefetchScalarGridSpec(
          num_scalar_prefetch=0,
          grid=(B, S // Ts),
          in_specs=[
              pl.BlockSpec((1, Ts, C), lambda b, i: (b, i, 0)),   # x tile
              pl.BlockSpec((C, HD), lambda b, i: (0, 0)),         # W_q (scaled)
              pl.BlockSpec((C, HD), lambda b, i: (0, 0)),         # W_k
              pl.BlockSpec((C, HD), lambda b, i: (0, 0)),         # W_v
          ],
          out_specs=(
              pl.BlockSpec((1, H, Ts, D), lambda b, i: (b, 0, i, 0)),
              pl.BlockSpec((1, H, D, Ts), lambda b, i: (b, 0, 0, i)),
              pl.BlockSpec((1, H, Ts, D), lambda b, i: (b, 0, i, 0)),
          ),
      ),
      compiler_params=pltpu.CompilerParams(
          dimension_semantics=("parallel", "parallel"),
          vmem_limit_bytes=vmem_limit,
      ),
  )(xb, w_q, w_k, w_v)

  # ---- Pass 2: flash attention + fused output projection ------------------
  Tq = _pick_tile(S, q_tile, 8)
  Tk = _pick_tile(S, kv_tile, 128)   # K^T last dim must be 128-aligned (or full)
  attn_kernel = partial(_flash_attention_kernel, num_heads=H, head_dim=D)
  out = pl.pallas_call(
      attn_kernel,
      out_shape=jax.ShapeDtypeStruct((B, S, C), x.dtype),
      grid_spec=pltpu.PrefetchScalarGridSpec(
          num_scalar_prefetch=0,
          grid=(B, S // Tq, S // Tk),
          in_specs=[
              pl.BlockSpec((1, H, Tq, D), lambda b, i, j: (b, 0, i, 0)),  # Q
              pl.BlockSpec((1, H, D, Tk), lambda b, i, j: (b, 0, 0, j)),  # K^T
              pl.BlockSpec((1, H, Tk, D), lambda b, i, j: (b, 0, j, 0)),  # V
              pl.BlockSpec((HD, C), lambda b, i, j: (0, 0)),              # W_proj
              pl.BlockSpec((1, C), lambda b, i, j: (0, 0)),               # b_proj
          ],
          out_specs=pl.BlockSpec((1, Tq, C), lambda b, i, j: (b, i, 0)),
          scratch_shapes=[
              pltpu.VMEM((H, Tq, 1), jnp.float32),    # running max
              pltpu.VMEM((H, Tq, 1), jnp.float32),    # running sum
              pltpu.VMEM((H, Tq, D), jnp.float32),    # running PV accumulator
          ],
      ),
      compiler_params=pltpu.CompilerParams(
          dimension_semantics=("parallel", "parallel", "arbitrary"),
          vmem_limit_bytes=vmem_limit,
      ),
  )(q, kt, v, w_o, b_o)
  return out


# ---------------------------------------------------------------------------
# Pure-f32 JAX reference with the module's exact (use_sdpa=True) semantics.
# ---------------------------------------------------------------------------
def reference(x, w_qkv, w_proj, b_proj, num_heads, head_dim):
  B, S, C = x.shape
  qkv = x @ w_qkv
  qkv = qkv.reshape(B, S, num_heads, 3 * head_dim)
  q = qkv[..., :head_dim]
  k = qkv[..., head_dim:2 * head_dim]
  v = qkv[..., 2 * head_dim:]
  q, k, v = (jnp.transpose(t, (0, 2, 1, 3)) for t in (q, k, v))
  logits = jnp.einsum("bhmd,bhnd->bhmn", q, k) / math.sqrt(head_dim)
  w = jax.nn.softmax(logits, axis=-1)
  out = jnp.einsum("bhmn,bhnd->bhmd", w, v)
  out = jnp.transpose(out, (0, 2, 1, 3)).reshape(B, S, num_heads * head_dim)
  return out @ w_proj + b_proj


def _run_case(key, B, S, C, num_heads, head_dim, q_tile, kv_tile):
  HD = num_heads * head_dim
  kx, kq, kp, kb = jax.random.split(key, 4)
  x = jax.random.normal(kx, (B, S, C), dtype=jnp.float32)
  # Synthetic torch-Linear-style parameters, stored (in, out); qkv_bias=False.
  w_qkv = jax.random.normal(kq, (C, 3 * HD), dtype=jnp.float32) / math.sqrt(C)
  w_proj = jax.random.normal(kp, (HD, C), dtype=jnp.float32) / math.sqrt(HD)
  b_proj = jax.random.normal(kb, (C,), dtype=jnp.float32) * 0.02

  params = prepare_params(w_qkv, w_proj, b_proj,
                          num_heads=num_heads, head_dim=head_dim)
  out = self_attention(x, params, num_heads=num_heads, head_dim=head_dim,
                       q_tile=q_tile, kv_tile=kv_tile)
  out = jax.block_until_ready(out)

  ref = reference(x, w_qkv, w_proj, b_proj, num_heads, head_dim)
  assert out.shape == (B, S, C)
  # bf16 MXU operands + approx reciprocal => bf16-level tolerance vs f32 ref.
  assert jnp.allclose(out, ref, atol=5e-2, rtol=5e-2), \
      f"mismatch vs JAX reference (max abs err {jnp.max(jnp.abs(out - ref))})"


if __name__ == "__main__":
  key = jax.random.PRNGKey(0)
  k1, k2 = jax.random.split(key)

  # Module-consistent small shapes: single-tile attention per batch
  # (grid (2,1,1)) -- the recommended regime for tiny problems.
  _run_case(k1, B=2, S=16, C=32, num_heads=4, head_dim=8,
            q_tile=256, kv_tile=256)

  # Medium case exercising the multi-tile flash path (grid (2,2,2)) with
  # 128-aligned Q/K tiles and the pre-transposed K layout.
  _run_case(k2, B=2, S=256, C=32, num_heads=4, head_dim=8,
            q_tile=128, kv_tile=128)

  print("KERNEL_OK")
</pallas_src>

<mosaic_0001>
module attributes {stable_mosaic.version = 11 : i64} {
  func.func @_qkv_projection_kernel(%arg0: i32, %arg1: i32, %arg2: memref<1x16x32xbf16, #tpu.memory_space<vmem>>, %arg3: memref<32x32xbf16, #tpu.memory_space<vmem>>, %arg4: memref<32x32xbf16, #tpu.memory_space<vmem>>, %arg5: memref<32x32xbf16, #tpu.memory_space<vmem>>, %arg6: memref<1x4x16x8xbf16, #tpu.memory_space<vmem>>, %arg7: memref<1x4x8x16xbf16, #tpu.memory_space<vmem>>, %arg8: memref<1x4x16x8xbf16, #tpu.memory_space<vmem>>) attributes {dimension_semantics = [#tpu.dimension_semantics<parallel>, #tpu.dimension_semantics<parallel>], iteration_bounds = array<i64: 2, 1>, scalar_prefetch = 0 : i64, scratch_operands = 0 : i64, tpu.core_type = #tpu.core_type<tc>, window_params = [{transform_indices = @transform_0, window_bounds = array<i64: 1, 16, 32>}, {pipeline_mode = #tpu.pipeline_mode<synchronous>, transform_indices = @transform_1, window_bounds = array<i64: 32, 32>}, {pipeline_mode = #tpu.pipeline_mode<synchronous>, transform_indices = @transform_2, window_bounds = array<i64: 32, 32>}, {pipeline_mode = #tpu.pipeline_mode<synchronous>, transform_indices = @transform_3, window_bounds = array<i64: 32, 32>}, {transform_indices = @transform_4, window_bounds = array<i64: 1, 4, 16, 8>}, {transform_indices = @transform_5, window_bounds = array<i64: 1, 4, 8, 16>}, {transform_indices = @transform_6, window_bounds = array<i64: 1, 4, 16, 8>}]} {
    %c0 = arith.constant 0 : index
    %c0_0 = arith.constant 0 : index
    %c0_1 = arith.constant 0 : index
    %0 = vector.load %arg2[%c0, %c0_0, %c0_1] : memref<1x16x32xbf16, #tpu.memory_space<vmem>>, vector<1x16x32xbf16>
    %1 = vector.shape_cast %0 : vector<1x16x32xbf16> to vector<16x32xbf16>
    %c0_2 = arith.constant 0 : index
    %c0_3 = arith.constant 0 : index
    %2 = vector.load %arg3[%c0_2, %c0_3] : memref<32x32xbf16, #tpu.memory_space<vmem>>, vector<32x32xbf16>
    %cst = arith.constant dense<0.000000e+00> : vector<16x32xf32>
    %3 = tpu.matmul %1, %2, %cst {dimension_numbers = #tpu.dot_dimension_numbers<[1], [0], [0], [1], [0, 0, 1, 1], [], []>} : vector<16x32xbf16>, vector<32x32xbf16>, vector<16x32xf32> -> vector<16x32xf32>
    %c0_4 = arith.constant 0 : index
    %c0_5 = arith.constant 0 : index
    %4 = vector.load %arg4[%c0_4, %c0_5] : memref<32x32xbf16, #tpu.memory_space<vmem>>, vector<32x32xbf16>
    %cst_6 = arith.constant dense<0.000000e+00> : vector<16x32xf32>
    %5 = tpu.matmul %1, %4, %cst_6 {dimension_numbers = #tpu.dot_dimension_numbers<[1], [0], [0], [1], [0, 0, 1, 1], [], []>} : vector<16x32xbf16>, vector<32x32xbf16>, vector<16x32xf32> -> vector<16x32xf32>
    %c0_7 = arith.constant 0 : index
    %c0_8 = arith.constant 0 : index
    %6 = vector.load %arg5[%c0_7, %c0_8] : memref<32x32xbf16, #tpu.memory_space<vmem>>, vector<32x32xbf16>
    %cst_9 = arith.constant dense<0.000000e+00> : vector<16x32xf32>
    %7 = tpu.matmul %1, %6, %cst_9 {dimension_numbers = #tpu.dot_dimension_numbers<[1], [0], [0], [1], [0, 0, 1, 1], [], []>} : vector<16x32xbf16>, vector<32x32xbf16>, vector<16x32xf32> -> vector<16x32xf32>
    %8 = vector.shape_cast %3 : vector<16x32xf32> to vector<16x4x8xf32>
    %9 = tpu.transpose %8, [1, 0, 2] : vector<16x4x8xf32> -> vector<4x16x8xf32>
    %10 = arith.truncf %9 : vector<4x16x8xf32> to vector<4x16x8xbf16>
    %c0_10 = arith.constant 0 : index
    %c0_11 = arith.constant 0 : index
    %c0_12 = arith.constant 0 : index
    %c0_13 = arith.constant 0 : index
    %11 = vector.load %arg6[%c0_10, %c0_11, %c0_12, %c0_13] : memref<1x4x16x8xbf16, #tpu.memory_space<vmem>>, vector<1x4x16x8xbf16>
    %12 = vector.shape_cast %11 : vector<1x4x16x8xbf16> to vector<4x16x8xbf16>
    %13 = vector.shape_cast %10 : vector<4x16x8xbf16> to vector<1x4x16x8xbf16>
    tpu.vector_store %arg6[%c0_10, %c0_11, %c0_12, %c0_13], %13 {strides = array<i32>} : memref<1x4x16x8xbf16, #tpu.memory_space<vmem>>, vector<1x4x16x8xbf16>,
    %14 = vector.shape_cast %5 : vector<16x32xf32> to vector<16x4x8xf32>
    %15 = tpu.transpose %14, [1, 2, 0] : vector<16x4x8xf32> -> vector<4x8x16xf32>
    %16 = arith.truncf %15 : vector<4x8x16xf32> to vector<4x8x16xbf16>
    %c0_14 = arith.constant 0 : index
    %c0_15 = arith.constant 0 : index
    %c0_16 = arith.constant 0 : index
    %c0_17 = arith.constant 0 : index
    %17 = vector.load %arg7[%c0_14, %c0_15, %c0_16, %c0_17] : memref<1x4x8x16xbf16, #tpu.memory_space<vmem>>, vector<1x4x8x16xbf16>
    %18 = vector.shape_cast %17 : vector<1x4x8x16xbf16> to vector<4x8x16xbf16>
    %19 = vector.shape_cast %16 : vector<4x8x16xbf16> to vector<1x4x8x16xbf16>
    tpu.vector_store %arg7[%c0_14, %c0_15, %c0_16, %c0_17], %19 {strides = array<i32>} : memref<1x4x8x16xbf16, #tpu.memory_space<vmem>>, vector<1x4x8x16xbf16>,
    %20 = vector.shape_cast %7 : vector<16x32xf32> to vector<16x4x8xf32>
    %21 = tpu.transpose %20, [1, 0, 2] : vector<16x4x8xf32> -> vector<4x16x8xf32>
    %22 = arith.truncf %21 : vector<4x16x8xf32> to vector<4x16x8xbf16>
    %c0_18 = arith.constant 0 : index
    %c0_19 = arith.constant 0 : index
    %c0_20 = arith.constant 0 : index
    %c0_21 = arith.constant 0 : index
    %23 = vector.load %arg8[%c0_18, %c0_19, %c0_20, %c0_21] : memref<1x4x16x8xbf16, #tpu.memory_space<vmem>>, vector<1x4x16x8xbf16>
    %24 = vector.shape_cast %23 : vector<1x4x16x8xbf16> to vector<4x16x8xbf16>
    %25 = vector.shape_cast %22 : vector<4x16x8xbf16> to vector<1x4x16x8xbf16>
    tpu.vector_store %arg8[%c0_18, %c0_19, %c0_20, %c0_21], %25 {strides = array<i32>} : memref<1x4x16x8xbf16, #tpu.memory_space<vmem>>, vector<1x4x16x8xbf16>,
    return
  }
  func.func @transform_0(%arg0: i32, %arg1: i32) -> (i32, i32, i32) {
    %c0_i32 = arith.constant 0 : i32
    %c0_i32_0 = arith.constant 0 : i32
    return %arg0, %arg1, %c0_i32 : i32, i32, i32
  }
  func.func @transform_1(%arg0: i32, %arg1: i32) -> (i32, i32) {
    %c0_i32 = arith.constant 0 : i32
    %c0_i32_0 = arith.constant 0 : i32
    %c0_i32_1 = arith.constant 0 : i32
    return %c0_i32, %c0_i32_0 : i32, i32
  }
  func.func @transform_2(%arg0: i32, %arg1: i32) -> (i32, i32) {
    %c0_i32 = arith.constant 0 : i32
    %c0_i32_0 = arith.constant 0 : i32
    %c0_i32_1 = arith.constant 0 : i32
    return %c0_i32, %c0_i32_0 : i32, i32
  }
  func.func @transform_3(%arg0: i32, %arg1: i32) -> (i32, i32) {
    %c0_i32 = arith.constant 0 : i32
    %c0_i32_0 = arith.constant 0 : i32
    %c0_i32_1 = arith.constant 0 : i32
    return %c0_i32, %c0_i32_0 : i32, i32
  }
  func.func @transform_4(%arg0: i32, %arg1: i32) -> (i32, i32, i32, i32) {
    %c0_i32 = arith.constant 0 : i32
    %c0_i32_0 = arith.constant 0 : i32
    %c0_i32_1 = arith.constant 0 : i32
    return %arg0, %c0_i32, %arg1, %c0_i32_0 : i32, i32, i32, i32
  }
  func.func @transform_5(%arg0: i32, %arg1: i32) -> (i32, i32, i32, i32) {
    %c0_i32 = arith.constant 0 : i32
    %c0_i32_0 = arith.constant 0 : i32
    %c0_i32_1 = arith.constant 0 : i32
    return %arg0, %c0_i32, %c0_i32_0, %arg1 : i32, i32, i32, i32
  }
  func.func @transform_6(%arg0: i32, %arg1: i32) -> (i32, i32, i32, i32) {
    %c0_i32 = arith.constant 0 : i32
    %c0_i32_0 = arith.constant 0 : i32
    %c0_i32_1 = arith.constant 0 : i32
    return %arg0, %c0_i32, %arg1, %c0_i32_0 : i32, i32, i32, i32
  }
}

</mosaic_0001>

<llo_original>
// kernel: tpu_custom_call.1
$region0: #{tpu_custom_call.1}
  #allocation0 [shape = 'u32[]', space=smem, size = 0x4, offset = 0x4, fixed_abs, tag = 'smem constant byte address 0x4 - core index']
  #allocation1 [shape = 'u32[144,128]{1,0:T(1,128)}', space=vmem, size = 0x12000, scoped, tag = 'internal scratch']
  %s0 = inlined_call_operand.hbm [shape: bf16[2,16,32], index: 0, kind: input, shape index: {}]
  %s1 = inlined_call_operand.hbm [shape: bf16[32,32], index: 1, kind: input, shape index: {}]
  %s2 = inlined_call_operand.hbm [shape: bf16[32,32], index: 2, kind: input, shape index: {}]
  %s3 = inlined_call_operand.hbm [shape: bf16[32,32], index: 3, kind: input, shape index: {}]
  %s4 = inlined_call_operand.vmem [shape: bf16[2,4,16,8], index: 4, kind: output, shape index: {0}]
  %s5 = inlined_call_operand.hbm [shape: bf16[2,4,8,16], index: 5, kind: output, shape index: {1}]
  %s6 = inlined_call_operand.vmem [shape: bf16[2,4,16,8], index: 6, kind: output, shape index: {2}]
  %7 = xla_tuple %s4, %s5, %s6
  %s8 = sld [smem:[#allocation0]]
  $region81: #{tpu_custom_call.1} parent=0
    _
  %s10 = ssub.s32 1, %s8
  %s11 = scalar_select 0, %s10, %s8
  $region1: #{tpu_custom_call.1} parent=0
    #allocation2 [shape = 'u8[8192]{0}', space=vmem, size = 0x2000, scoped, tag = 'input window, operand 0']
    #allocation3 [shape = 's32[2]{0}', space=sflag, size = 0x8, scoped, tag = 'scoped memory for tpu_custom_call.1']
    #allocation4 [shape = 's32[2]{0}', space=sflag, size = 0x8, scoped, tag = 'scoped memory for tpu_custom_call.1']
    #allocation5 [shape = 'u8[8192]{0}', space=vmem, size = 0x2000, scoped, tag = 'input window, operand 1, single buffered']
    #allocation6 [shape = 's32[1]{0}', space=sflag, size = 0x4, scoped, tag = 'scoped memory for tpu_custom_call.1']
    #allocation7 [shape = 'u8[8192]{0}', space=vmem, size = 0x2000, scoped, tag = 'input window, operand 2, single buffered']
    #allocation8 [shape = 'u8[8192]{0}', space=vmem, size = 0x2000, scoped, tag = 'input window, operand 3, single buffered']
    #allocation9 [shape = 's32[1]{0}', space=sflag, size = 0x4, scoped, tag = 'scoped memory for tpu_custom_call.1']
    #allocation10 [shape = 'u8[16384]{0}', space=vmem, size = 0x4000, scoped, tag = 'output window, operand 1']
    %12 = vsyncpa [#allocation3], 0
    %s13 = scalar_lea.sflag [#allocation3], 1
    %14 = vsyncpa %s13, 0
    %15 = vsyncpa [#allocation6], 0
    %16 = vsyncpa [#allocation9], 0
    %17 = vsyncpa [#allocation4], 0
    %s18 = scalar_lea.sflag [#allocation4], 1
    %19 = vsyncpa %s18, 0
    loop: start=0, step=1, limit=4
    $region2: #{tpu_custom_call.1} parent=1 // loop_pre_header
      _
    $region3: #{tpu_custom_call.1} parent=1 // loop_header
      %s21 = sphi 0, %s25
      %p22 = scmp.ge.s32.totalorder %s21, 4
      %s28 = sphi 0, %s40
      %s29 = sphi 0, %s36
      %s30 = sphi 0, %s28
      %s31 = sphi 0, %s29
      %s32 = sphi 0, %s30
      %s33 = sphi 0, %s31
      %s45 = sphi 0, %s47
      %s48 = sphi 0, %s45
      %s49 = sphi 0, %s48
      %s65 = sphi 0, %s49
      %s69 = sphi 0, %s69
      %s71 = sphi 0, %s69
      %s72 = sphi 0, %s71
      %s86 = sphi 0, %s72
      %s90 = sphi 0, %s90
      %s92 = sphi 0, %s90
      %s93 = sphi 0, %s92
      %s107 = sphi 0, %s93
      %s111 = sphi 0, %s111
      %s113 = sphi 0, %s111
      %s114 = sphi 0, %s113
      %s128 = sphi 0, %s114
      %s136 = sphi 0, %s138
      %s139 = sphi 0, %s136
      %s140 = sphi 0, %s139
      %s156 = sphi 0, %s140
      %s164 = sphi 0, %s166
      %s167 = sphi 0, %s164
      %s168 = sphi 0, %s167
      %s184 = sphi 0, %s168
      %s192 = sphi 0, %s194
      %s195 = sphi 0, %s192
      %s196 = sphi 0, %s195
      %s212 = sphi 0, %s196
    $region4: #{tpu_custom_call.1} parent=1 // loop_header_branch
      %24 = sbr.rel (%p22) target = $region8
    $region5: #{tpu_custom_call.1} parent=1 // loop_body
      %s26 = ssub.s32 %s21, 1
      %s27 = ssub.s32 %s21, 2
      %s34 = sadd.s32 1, %s29
      %p35 = scmp.ge.s32.totalorder %s34, 1
      %s36 = scalar_select %p35, 0, %s34
      %s37 = sadd.s32 1, %s28
      %s38 = scalar_select %p35, %s37, %s28
      %p39 = scmp.ge.s32.totalorder %s38, 2
      %s40 = scalar_select %p39, 0, %s38
      %s41 = ssub.s32 %s28, %s40
      %s42 = ssub.s32 %s29, %s36
      %s43 = sor.u32 %s41, %s42
      %p44 = scmp.eq.s32.totalorder %s43, 0
      %s46 = sadd.s32 %s45, 1
      %s47 = scalar_select %p44, %s45, %s46
      %p50 = pneg %p44
      %p51 = scmp.eq.s32.totalorder %s21, 1
      %p52 = por %p50, %p51
      %p53 = scmp.ne.s32.totalorder %s45, %s48
      %p54 = scmp.eq.s32.totalorder %s21, 0
      %p55 = por %p53, %p54
      %p56 = scmp.ne.s32.totalorder %s45, %s48
      %p57 = scmp.eq.s32.totalorder %s26, 1
      %p58 = por %p56, %p57
      %p59 = scmp.ne.s32.totalorder %s48, %s49
      %p60 = scmp.eq.s32.totalorder %s26, 0
      %p61 = por %p59, %p60
      %p62 = scmp.ne.s32.totalorder %s48, %s49
      %p63 = scmp.eq.s32.totalorder %s27, 1
      %p64 = por %p62, %p63
      %p66 = scmp.ne.s32.totalorder %s49, %s65
      %p67 = scmp.eq.s32.totalorder %s27, 0
      %p68 = por %p66, %p67
      %s70 = sadd.s32 %s69, 1
      %p73 = scmp.eq.s32.totalorder %s21, 1
      %p74 = scmp.ne.s32.totalorder %s69, %s71
      %p75 = scmp.eq.s32.totalorder %s21, 0
      %p76 = por %p74, %p75
      %p77 = scmp.ne.s32.totalorder %s69, %s71
      %p78 = scmp.eq.s32.totalorder %s26, 1
      %p79 = por %p77, %p78
      %p80 = scmp.ne.s32.totalorder %s71, %s72
      %p81 = scmp.eq.s32.totalorder %s26, 0
      %p82 = por %p80, %p81
      %p83 = scmp.ne.s32.totalorder %s71, %s72
      %p84 = scmp.eq.s32.totalorder %s27, 1
      %p85 = por %p83, %p84
      %p87 = scmp.ne.s32.totalorder %s72, %s86
      %p88 = scmp.eq.s32.totalorder %s27, 0
      %p89 = por %p87, %p88
      %s91 = sadd.s32 %s90, 1
      %p94 = scmp.eq.s32.totalorder %s21, 1
      %p95 = scmp.ne.s32.totalorder %s90, %s92
      %p96 = scmp.eq.s32.totalorder %s21, 0
      %p97 = por %p95, %p96
      %p98 = scmp.ne.s32.totalorder %s90, %s92
      %p99 = scmp.eq.s32.totalorder %s26, 1
      %p100 = por %p98, %p99
      %p101 = scmp.ne.s32.totalorder %s92, %s93
      %p102 = scmp.eq.s32.totalorder %s26, 0
      %p103 = por %p101, %p102
      %p104 = scmp.ne.s32.totalorder %s92, %s93
      %p105 = scmp.eq.s32.totalorder %s27, 1
      %p106 = por %p104, %p105
      %p108 = scmp.ne.s32.totalorder %s93, %s107
      %p109 = scmp.eq.s32.totalorder %s27, 0
      %p110 = por %p108, %p109
      %s112 = sadd.s32 %s111, 1
      %p115 = scmp.eq.s32.totalorder %s21, 1
      %p116 = scmp.ne.s32.totalorder %s111, %s113
      %p117 = scmp.eq.s32.totalorder %s21, 0
      %p118 = por %p116, %p117
      %p119 = scmp.ne.s32.totalorder %s111, %s113
      %p120 = scmp.eq.s32.totalorder %s26, 1
      %p121 = por %p119, %p120
      %p122 = scmp.ne.s32.totalorder %s113, %s114
      %p123 = scmp.eq.s32.totalorder %s26, 0
      %p124 = por %p122, %p123
      %p125 = scmp.ne.s32.totalorder %s113, %s114
      %p126 = scmp.eq.s32.totalorder %s27, 1
      %p127 = por %p125, %p126
      %p129 = scmp.ne.s32.totalorder %s114, %s128
      %p130 = scmp.eq.s32.totalorder %s27, 0
      %p131 = por %p129, %p130
      %s132 = ssub.s32 %s28, %s40
      %s133 = ssub.s32 %s29, %s36
      %s134 = sor.u32 %s132, %s133
      %p135 = scmp.eq.s32.totalorder %s134, 0
      %s137 = sadd.s32 %s136, 1
      %s138 = scalar_select %p135, %s136, %s137
      %p141 = pneg %p135
      %p142 = scmp.eq.s32.totalorder %s21, 1
      %p143 = por %p141, %p142
      %p144 = scmp.ne.s32.totalorder %s136, %s139
      %p145 = scmp.eq.s32.totalorder %s21, 0
      %p146 = por %p144, %p145
      %p147 = scmp.ne.s32.totalorder %s136, %s139
      %p148 = scmp.eq.s32.totalorder %s26, 1
      %p149 = por %p147, %p148
      %p150 = scmp.ne.s32.totalorder %s139, %s140
      %p151 = scmp.eq.s32.totalorder %s26, 0
      %p152 = por %p150, %p151
      %p153 = scmp.ne.s32.totalorder %s139, %s140
      %p154 = scmp.eq.s32.totalorder %s27, 1
      %p155 = por %p153, %p154
      %p157 = scmp.ne.s32.totalorder %s140, %s156
      %p158 = scmp.eq.s32.totalorder %s27, 0
      %p159 = por %p157, %p158
      %s160 = ssub.s32 %s28, %s40
      %s161 = ssub.s32 %s29, %s36
      %s162 = sor.u32 %s160, %s161
      %p163 = scmp.eq.s32.totalorder %s162, 0
      %s165 = sadd.s32 %s164, 1
      %s166 = scalar_select %p163, %s164, %s165
      %p169 = pneg %p163
      %p170 = scmp.eq.s32.totalorder %s21, 1
      %p171 = por %p169, %p170
      %p172 = scmp.ne.s32.totalorder %s164, %s167
      %p173 = scmp.eq.s32.totalorder %s21, 0
      %p174 = por %p172, %p173
      %p175 = scmp.ne.s32.totalorder %s164, %s167
      %p176 = scmp.eq.s32.totalorder %s26, 1
      %p177 = por %p175, %p176
      %p178 = scmp.ne.s32.totalorder %s167, %s168
      %p179 = scmp.eq.s32.totalorder %s26, 0
      %p180 = por %p178, %p179
      %p181 = scmp.ne.s32.totalorder %s167, %s168
      %p182 = scmp.eq.s32.totalorder %s27, 1
      %p183 = por %p181, %p182
      %p185 = scmp.ne.s32.totalorder %s168, %s184
      %p186 = scmp.eq.s32.totalorder %s27, 0
      %p187 = por %p185, %p186
      %s188 = ssub.s32 %s28, %s40
      %s189 = ssub.s32 %s29, %s36
      %s190 = sor.u32 %s188, %s189
      %p191 = scmp.eq.s32.totalorder %s190, 0
      %s193 = sadd.s32 %s192, 1
      %s194 = scalar_select %p191, %s192, %s193
      %p197 = pneg %p191
      %p198 = scmp.eq.s32.totalorder %s21, 1
      %p199 = por %p197, %p198
      %p200 = scmp.ne.s32.totalorder %s192, %s195
      %p201 = scmp.eq.s32.totalorder %s21, 0
      %p202 = por %p200, %p201
      %p203 = scmp.ne.s32.totalorder %s192, %s195
      %p204 = scmp.eq.s32.totalorder %s26, 1
      %p205 = por %p203, %p204
      %p206 = scmp.ne.s32.totalorder %s195, %s196
      %p207 = scmp.eq.s32.totalorder %s26, 0
      %p208 = por %p206, %p207
      %p209 = scmp.ne.s32.totalorder %s195, %s196
      %p210 = scmp.eq.s32.totalorder %s27, 1
      %p211 = por %p209, %p210
      %p213 = scmp.ne.s32.totalorder %s196, %s212
      %p214 = scmp.eq.s32.totalorder %s27, 0
      %p215 = por %p213, %p214
      %p216 = scmp.le.s32.totalorder 1, %s21
      %p217 = scmp.lt.s32.totalorder %s21, 3
      %p218 = pnand %p216, %p217
      %p219 = pneg %p218
      // Predicated region
      $region9: #{tpu_custom_call.1} parent=5 // pred_check
        _
      $region10: #{tpu_custom_call.1} parent=5 // pred_check_branch
        %221 = sbr.rel (%p218) target = $region12
      $region11: #{tpu_custom_call.1} parent=5 // pred_region
        %s222 = ssub.s32 %s21, 1
        // Predicated region
        $region13: #{tpu_custom_call.1} parent=11 // pred_check
          %p223 = pneg %p82
        $region14: #{tpu_custom_call.1} parent=11 // pred_check_branch
          %225 = sbr.rel (%p223) target = $region16
        $region15: #{tpu_custom_call.1} parent=11 // pred_region
          %s227 = ssub.s32 256, 256
          %228 = vsyncadd [#allocation6], %s227
          %s229 = sshll.u32 [#allocation5], 4
          %s230 = int_to_ptr.vmem [resolvable:$true] %s229
          %235 = dma.hbm_to_vmem [thread:$0]  %s1, 256, %s230, [#allocation6], 64, 64, 4
        $region16: #{tpu_custom_call.1} parent=11 // pred_fallthru
          _
        // Predicated region
        $region17: #{tpu_custom_call.1} parent=11 // pred_check
          %p236 = pneg %p103
        $region18: #{tpu_custom_call.1} parent=11 // pred_check_branch
          %238 = sbr.rel (%p236) target = $region20
        $region19: #{tpu_custom_call.1} parent=11 // pred_region
          %s240 = ssub.s32 256, 256
          %241 = vsyncadd [#allocation6], %s240
          %s242 = sshll.u32 [#allocation7], 4
          %s243 = int_to_ptr.vmem [resolvable:$true] %s242
          %248 = dma.hbm_to_vmem [thread:$0]  %s2, 256, %s243, [#allocation6], 64, 64, 4
        $region20: #{tpu_custom_call.1} parent=11 // pred_fallthru
          _
        // Predicated region
        $region21: #{tpu_custom_call.1} parent=11 // pred_check
          %p249 = pneg %p124
        $region22: #{tpu_custom_call.1} parent=11 // pred_check_branch
          %251 = sbr.rel (%p249) target = $region24
        $region23: #{tpu_custom_call.1} parent=11 // pred_region
          %s253 = ssub.s32 256, 256
          %254 = vsyncadd [#allocation9], %s253
          %s255 = sshll.u32 [#allocation8], 4
          %s256 = int_to_ptr.vmem [resolvable:$true] %s255
          %261 = dma.hbm_to_vmem [thread:$0]  %s3, 256, %s256, [#allocation9], 64, 64, 4
        $region24: #{tpu_custom_call.1} parent=11 // pred_fallthru
          _
      $region12: #{tpu_custom_call.1} parent=5 // pred_fallthru
        _
      %p262 = scmp.lt.s32.totalorder %s21, 2
      // Predicated region
      $region25: #{tpu_custom_call.1} parent=5 // pred_check
        %p263 = pneg %p262
      $region26: #{tpu_custom_call.1} parent=5 // pred_check_branch
        %265 = sbr.rel (%p263) target = $region28
      $region27: #{tpu_custom_call.1} parent=5 // pred_region
        // Predicated region
        $region29: #{tpu_custom_call.1} parent=27 // pred_check
          %p266 = pneg %p55
        $region30: #{tpu_custom_call.1} parent=27 // pred_check_branch
          %268 = sbr.rel (%p266) target = $region32
        $region31: #{tpu_custom_call.1} parent=27 // pred_region
          %s269 = sand.u32 %s45, 1
          %s270 = scalar_lea.sflag [#allocation3], %s269
          %s271 = sand.u32 %s45, 1
          %s272 = smul.addr %s271, 8
          %s273 = scalar_lea.vmem [#allocation2], %s272
          %s274 = smul.u32 2, %s29
          %s276 = ssub.s32 128, 128
          %277 = vsyncadd %s270, %s276
          %s278 = smul.addr %s28, 2
          %s279 = sadd.s32 %s274, %s278
          %s280 = smul.addr %s279, 64
          %s281 = scalar_lea.hbm %s0, %s280
          %s282 = sshll.u32 %s273, 4
          %s283 = int_to_ptr.vmem [resolvable:$true] %s282
          %288 = dma.hbm_to_vmem [thread:$0]  %s281, 128, %s283, %s270, 64, 64, 4
        $region32: #{tpu_custom_call.1} parent=27 // pred_fallthru
          _
      $region28: #{tpu_custom_call.1} parent=5 // pred_fallthru
        _
      %p289 = scmp.le.s32.totalorder 1, %s21
      %p290 = scmp.lt.s32.totalorder %s21, 3
      %p291 = pnand %p289, %p290
      %p292 = pneg %p291
      // Predicated region
      $region33: #{tpu_custom_call.1} parent=5 // pred_check
        _
      $region34: #{tpu_custom_call.1} parent=5 // pred_check_branch
        %294 = sbr.rel (%p291) target = $region36
      $region35: #{tpu_custom_call.1} parent=5 // pred_region
        %s295 = ssub.s32 %s21, 1
        %s296 = sand.u32 %s48, 1
        %s297 = scalar_lea.sflag [#allocation3], %s296
        %s298 = sand.u32 %s48, 1
        %s299 = smul.addr %s298, 8
        %s300 = scalar_lea.vmem [#allocation2], %s299
        // Predicated region
        $region37: #{tpu_custom_call.1} parent=35 // pred_check
          %p301 = pneg %p61
        $region38: #{tpu_custom_call.1} parent=35 // pred_check_branch
          %303 = sbr.rel (%p301) target = $region40
        $region39: #{tpu_custom_call.1} parent=35 // pred_region
          %304 = dma.done %s297, 128
        $region40: #{tpu_custom_call.1} parent=35 // pred_fallthru
          _
        // Predicated region
        $region41: #{tpu_custom_call.1} parent=35 // pred_check
          %p305 = pneg %p82
        $region42: #{tpu_custom_call.1} parent=35 // pred_check_branch
          %307 = sbr.rel (%p305) target = $region44
        $region43: #{tpu_custom_call.1} parent=35 // pred_region
          %308 = dma.done [#allocation6], 256
        $region44: #{tpu_custom_call.1} parent=35 // pred_fallthru
          _
        // Predicated region
        $region45: #{tpu_custom_call.1} parent=35 // pred_check
          %p309 = pneg %p103
        $region46: #{tpu_custom_call.1} parent=35 // pred_check_branch
          %311 = sbr.rel (%p309) target = $region48
        $region47: #{tpu_custom_call.1} parent=35 // pred_region
          %312 = dma.done [#allocation6], 256
        $region48: #{tpu_custom_call.1} parent=35 // pred_fallthru
          _
        // Predicated region
        $region49: #{tpu_custom_call.1} parent=35 // pred_check
          %p313 = pneg %p124
        $region50: #{tpu_custom_call.1} parent=35 // pred_check_branch
          %315 = sbr.rel (%p313) target = $region52
        $region51: #{tpu_custom_call.1} parent=35 // pred_region
          %316 = dma.done [#allocation9], 256
        $region52: #{tpu_custom_call.1} parent=35 // pred_fallthru
          _
        %s317 = sand.u32 %s48, 1
        %s318 = scalar_lea.sflag [#allocation3], %s317
        %s319 = sand.u32 %s48, 1
        %s320 = smul.addr %s319, 8
        %s321 = scalar_lea.vmem [#allocation2], %s320
        %p322 = pneg %p61
        %p323 = pneg %p58
        %p324 = pneg %p82
        %p325 = pneg %p79
        %p326 = pneg %p103
        %p327 = pneg %p100
        %p328 = pneg %p124
        %p329 = pneg %p121
        %p330 = pneg %p152
        %p331 = pneg %p149
        %s332 = smul.u32 2, %s31
        %p333 = scmp.lt.s32.totalorder %s30, 1
        %s334 = scalar_select %p333, %s30, 1
        %p335 = scmp.lt.s32.totalorder %s332, 1
        %s336 = scalar_select %p335, %s332, 1
        %s337 = smul.addr %s334, 8
        %s338 = sadd.s32 %s336, %s337
        %s339 = smul.addr %s338, 4
        %s340 = scalar_lea.vmem %s4, %s339
        %p341 = pneg %p180
        %p342 = pneg %p177
        %s343 = sand.u32 %s167, 1
        %s344 = scalar_lea.sflag [#allocation4], %s343
        %s345 = sand.u32 %s167, 1
        %s346 = smul.addr %s345, 16
        %s347 = scalar_lea.vmem [#allocation10], %s346
        %p348 = pneg %p208
        %p349 = pneg %p205
        %s350 = smul.u32 2, %s31
        %p351 = scmp.lt.s32.totalorder %s30, 1
        %s352 = scalar_select %p351, %s30, 1
        %p353 = scmp.lt.s32.totalorder %s350, 1
        %s354 = scalar_select %p353, %s350, 1
        %s355 = smul.addr %s352, 8
        %s356 = sadd.s32 %s354, %s355
        %s357 = smul.addr %s356, 4
        %s358 = scalar_lea.vmem %s6, %s357
        %s359 = smul.u32 2, %s31
        %s360 = smul.u32 2, %s31
        %p361 = scmp.lt.s32.totalorder %s30, 1
        %s362 = scalar_select %p361, %s30, 1
        %p363 = scmp.lt.s32.totalorder %s360, 1
        %s364 = scalar_select %p363, %s360, 1
        %s365 = smul.addr %s362, 8
        %s366 = sadd.s32 %s364, %s365
        %s367 = smul.addr %s366, 4
        %s368 = scalar_lea.vmem %s4, %s367
        %s369 = smul.u32 2, %s31
        %s370 = smul.u32 2, %s31
        %p371 = scmp.lt.s32.totalorder %s30, 1
        %s372 = scalar_select %p371, %s30, 1
        %p373 = scmp.lt.s32.totalorder %s370, 1
        %s374 = scalar_select %p373, %s370, 1
        %s375 = smul.addr %s372, 8
        %s376 = sadd.s32 %s374, %s375
        %s377 = smul.addr %s376, 4
        %s378 = scalar_lea.vmem %s6, %s377
        %s379 = smul.u32 2, %s31
        %v381 = vld [vmem:[%s300] sm:$0xf]
        %v382 = vld [vmem:[%s300 + $0x4] sm:$0xf]
        %v383 = vld [vmem:[#allocation5] sm:$0xf]
        %v384 = vld [vmem:[#allocation5 + $0x4] sm:$0xf]
        %v385 = vld [vmem:[#allocation5 + $0x8] sm:$0xf]
        %v386 = vld [vmem:[#allocation5 + $0xc] sm:$0xf]
        %v389 = vunpack.c.l.b16 %v381
        %v390 = vunpack.c.l.b16 %v382
        %v391 = vpack.c.b16 %v390, %v389
        %v396 = vunpack.c.l.b16 %v383
        %v397 = vunpack.c.l.b16 %v384
        %v398 = vunpack.c.l.b16 %v385
        %v399 = vunpack.c.l.b16 %v386
        %v400 = vpack.c.b16 %v397, %v396
        %v401 = vpack.c.b16 %v399, %v398
        %vm404 = vcmask 261120
        %v406 = vsel %vm404, %v391, 0
        %408 = vmatprep.subr.bf16.mxu0 0
        %409 = vmatpush1.bf16.msra.mxu0 %v400
        %410 = vmatprep.subr.bf16.mxu0 0
        %411 = vmatpush1.bf16.msra.mxu0 %v401
        %412 = vmatprep.subr.bf16.mxu0 0
        %413 = vmatpush1.bf16.msra.mxu0 0
        %414 = vmatprep.subr.bf16.mxu0 0
        %415 = vmatpush1.bf16.msra.mxu0 0
        %416 = vmatprep.subr.bf16.mxu0 0
        %417 = vmatpush1.bf16.msra.mxu0 0
        %418 = vmatprep.subr.bf16.mxu0 0
        %419 = vmatpush1.bf16.msra.mxu0 0
        %420 = vmatprep.subr.bf16.mxu0 0
        %421 = vmatpush1.bf16.msra.mxu0 0
        %422 = vmatprep.subr.bf16.mxu0 0
        %423 = vmatpush1.bf16.msra.mxu0 0
        %424 = vmatprep.subr.bf16.mxu0 0
        %425 = vmatpush1.bf16.msra.mxu0 0
        %426 = vmatprep.subr.bf16.mxu0 0
        %427 = vmatpush1.bf16.msra.mxu0 0
        %428 = vmatprep.subr.bf16.mxu0 0
        %429 = vmatpush1.bf16.msra.mxu0 0
        %430 = vmatprep.subr.bf16.mxu0 0
        %431 = vmatpush1.bf16.msra.mxu0 0
        %432 = vmatprep.subr.bf16.mxu0 0
        %433 = vmatpush1.bf16.msra.mxu0 0
        %434 = vmatprep.subr.bf16.mxu0 0
        %435 = vmatpush1.bf16.msra.mxu0 0
        %436 = vmatprep.subr.bf16.mxu0 0
        %437 = vmatpush1.bf16.msra.mxu0 0
        %438 = vmatprep.subr.bf16.mxu0 0
        %439 = vmatpush1.bf16.msra.mxu0 0
        %440 = vmatprep.mubr.bf16.mxu0 0
        %441 = vmatmul.mubr.bf16.gmra.mrb[0].mxu0 %v406
        %v442 = vpop.f32.mrb[0].mxu0
        %v443 = vadd.f32 0.0, %v442
        %v444 = vpop.f32.mrb[0].mxu0
        %v445 = vpop.f32.mrb[0].mxu0
        %v446 = vadd.f32 0.0, %v445
        %v447 = vpop.f32.mrb[0].mxu0
        %448 = vdwg.mxu0
        %v449 = vld [vmem:[#allocation7] sm:$0xf]
        %v450 = vld [vmem:[#allocation7 + $0x4] sm:$0xf]
        %v451 = vld [vmem:[#allocation7 + $0x8] sm:$0xf]
        %v452 = vld [vmem:[#allocation7 + $0xc] sm:$0xf]
        %v457 = vunpack.c.l.b16 %v449
        %v458 = vunpack.c.l.b16 %v450
        %v459 = vunpack.c.l.b16 %v451
        %v460 = vunpack.c.l.b16 %v452
        %v461 = vpack.c.b16 %v458, %v457
        %v462 = vpack.c.b16 %v460, %v459
        %465 = vmatprep.subr.bf16.mxu0 0
        %466 = vmatpush1.bf16.msra.mxu0 %v461
        %467 = vmatprep.subr.bf16.mxu0 0
        %468 = vmatpush1.bf16.msra.mxu0 %v462
        %469 = vmatprep.subr.bf16.mxu0 0
        %470 = vmatpush1.bf16.msra.mxu0 0
        %471 = vmatprep.subr.bf16.mxu0 0
        %472 = vmatpush1.bf16.msra.mxu0 0
        %473 = vmatprep.subr.bf16.mxu0 0
        %474 = vmatpush1.bf16.msra.mxu0 0
        %475 = vmatprep.subr.bf16.mxu0 0
        %476 = vmatpush1.bf16.msra.mxu0 0
        %477 = vmatprep.subr.bf16.mxu0 0
        %478 = vmatpush1.bf16.msra.mxu0 0
        %479 = vmatprep.subr.bf16.mxu0 0
        %480 = vmatpush1.bf16.msra.mxu0 0
        %481 = vmatprep.subr.bf16.mxu0 0
        %482 = vmatpush1.bf16.msra.mxu0 0
        %483 = vmatprep.subr.bf16.mxu0 0
        %484 = vmatpush1.bf16.msra.mxu0 0
        %485 = vmatprep.subr.bf16.mxu0 0
        %486 = vmatpush1.bf16.msra.mxu0 0
        %487 = vmatprep.subr.bf16.mxu0 0
        %488 = vmatpush1.bf16.msra.mxu0 0
        %489 = vmatprep.subr.bf16.mxu0 0
        %490 = vmatpush1.bf16.msra.mxu0 0
        %491 = vmatprep.subr.bf16.mxu0 0
        %492 = vmatpush1.bf16.msra.mxu0 0
        %493 = vmatprep.subr.bf16.mxu0 0
        %494 = vmatpush1.bf16.msra.mxu0 0
        %495 = vmatprep.subr.bf16.mxu0 0
        %496 = vmatpush1.bf16.msra.mxu0 0
        %497 = vmatprep.mubr.bf16.mxu0 0
        %498 = vmatmul.mubr.bf16.gmra.mrb[0].mxu0 %v406
        %v499 = vpop.f32.mrb[0].mxu0
        %v500 = vadd.f32 0.0, %v499
        %v501 = vpop.f32.mrb[0].mxu0
        %v502 = vpop.f32.mrb[0].mxu0
        %v503 = vadd.f32 0.0, %v502
        %v504 = vpop.f32.mrb[0].mxu0
        %505 = vdwg.mxu0
        %v506 = vld [vmem:[#allocation8] sm:$0xf]
        %v507 = vld [vmem:[#allocation8 + $0x4] sm:$0xf]
        %v508 = vld [vmem:[#allocation8 + $0x8] sm:$0xf]
        %v509 = vld [vmem:[#allocation8 + $0xc] sm:$0xf]
        %v514 = vunpack.c.l.b16 %v506
        %v515 = vunpack.c.l.b16 %v507
        %v516 = vunpack.c.l.b16 %v508
        %v517 = vunpack.c.l.b16 %v509
        %v518 = vpack.c.b16 %v515, %v514
        %v519 = vpack.c.b16 %v517, %v516
        %522 = vmatprep.subr.bf16.mxu0 0
        %523 = vmatpush1.bf16.msra.mxu0 %v518
        %524 = vmatprep.subr.bf16.mxu0 0
        %525 = vmatpush1.bf16.msra.mxu0 %v519
        %526 = vmatprep.subr.bf16.mxu0 0
        %527 = vmatpush1.bf16.msra.mxu0 0
        %528 = vmatprep.subr.bf16.mxu0 0
        %529 = vmatpush1.bf16.msra.mxu0 0
        %530 = vmatprep.subr.bf16.mxu0 0
        %531 = vmatpush1.bf16.msra.mxu0 0
        %532 = vmatprep.subr.bf16.mxu0 0
        %533 = vmatpush1.bf16.msra.mxu0 0
        %534 = vmatprep.subr.bf16.mxu0 0
        %535 = vmatpush1.bf16.msra.mxu0 0
        %536 = vmatprep.subr.bf16.mxu0 0
        %537 = vmatpush1.bf16.msra.mxu0 0
        %538 = vmatprep.subr.bf16.mxu0 0
        %539 = vmatpush1.bf16.msra.mxu0 0
        %540 = vmatprep.subr.bf16.mxu0 0
        %541 = vmatpush1.bf16.msra.mxu0 0
        %542 = vmatprep.subr.bf16.mxu0 0
        %543 = vmatpush1.bf16.msra.mxu0 0
        %544 = vmatprep.subr.bf16.mxu0 0
        %545 = vmatpush1.bf16.msra.mxu0 0
        %546 = vmatprep.subr.bf16.mxu0 0
        %547 = vmatpush1.bf16.msra.mxu0 0
        %548 = vmatprep.subr.bf16.mxu0 0
        %549 = vmatpush1.bf16.msra.mxu0 0
        %550 = vmatprep.subr.bf16.mxu0 0
        %551 = vmatpush1.bf16.msra.mxu0 0
        %552 = vmatprep.subr.bf16.mxu0 0
        %553 = vmatpush1.bf16.msra.mxu0 0
        %554 = vmatprep.mubr.bf16.mxu0 0
        %555 = vmatmul.mubr.bf16.gmra.mrb[0].mxu0 %v406
        %v556 = vpop.f32.mrb[0].mxu0
        %v557 = vadd.f32 0.0, %v556
        %v558 = vpop.f32.mrb[0].mxu0
        %v559 = vpop.f32.mrb[0].mxu0
        %v560 = vadd.f32 0.0, %v559
        %v561 = vpop.f32.mrb[0].mxu0
        %562 = vdwg.mxu0
        %565 = vrot.lane.b32.xlu0 %v443, 120
        %v566 = vpop.permute.xlu0 %565
        %567 = vrot.lane.b32.xlu0 %v446, 120
        %v568 = vpop.permute.xlu0 %567
        %571 = vrot.lane.b32.xlu0 %v443, 112
        %v572 = vpop.permute.xlu0 %571
        %573 = vrot.lane.b32.xlu0 %v446, 112
        %v574 = vpop.permute.xlu0 %573
        %577 = vrot.lane.b32.xlu0 %v443, 104
        %v578 = vpop.permute.xlu0 %577
        %579 = vrot.lane.b32.xlu0 %v446, 104
        %v580 = vpop.permute.xlu0 %579
        %v583 = vcombine.low %v443, %v572
        %v584 = vcombine.high %v443, %v572
        %v586 = vunpack.c.l.s4 1983009808
        %v587 = vunpack.c.0.s8 %v586
        %v588 = vlaneseq
        %v589 = vshrl.u32 %v588, 7
        %v590 = vsub.s32 %v587, %v589
        %v591 = vrot.slane %v583, %v590
        %v593 = vunpack.c.l.s4 1983009808
        %v594 = vunpack.c.0.s8 %v593
        %v595 = vlaneseq
        %v596 = vshrl.u32 %v595, 7
        %v597 = vsub.s32 %v594, %v596
        %v598 = vrot.slane %v584, %v597
        %v599 = vcombine.low %v566, %v578
        %v600 = vcombine.high %v566, %v578
        %v602 = vunpack.c.l.s4 1983009808
        %v603 = vunpack.c.0.s8 %v602
        %v604 = vlaneseq
        %v605 = vshrl.u32 %v604, 7
        %v606 = vsub.s32 %v603, %v605
        %v607 = vrot.slane %v599, %v606
        %v609 = vunpack.c.l.s4 1983009808
        %v610 = vunpack.c.0.s8 %v609
        %v611 = vlaneseq
        %v612 = vshrl.u32 %v611, 7
        %v613 = vsub.s32 %v610, %v612
        %v614 = vrot.slane %v600, %v613
        %v615 = vcombine.low %v591, %v607
        %v616 = vcombine.high %v591, %v607
        %v618 = vunpack.c.l.s4 1934713408
        %v619 = vunpack.c.0.s8 %v618
        %v620 = vlaneseq
        %v621 = vshrl.u32 %v620, 7
        %v622 = vsub.s32 %v619, %v621
        %v623 = vrot.slane %v615, %v622
        %v625 = vunpack.c.l.s4 1934713408
        %v626 = vunpack.c.0.s8 %v625
        %v627 = vlaneseq
        %v628 = vshrl.u32 %v627, 7
        %v629 = vsub.s32 %v626, %v628
        %v630 = vrot.slane %v616, %v629
        %v631 = vcombine.low %v598, %v614
        %v632 = vcombine.high %v598, %v614
        %v634 = vunpack.c.l.s4 1934713408
        %v635 = vunpack.c.0.s8 %v634
        %v636 = vlaneseq
        %v637 = vshrl.u32 %v636, 7
        %v638 = vsub.s32 %v635, %v637
        %v639 = vrot.slane %v631, %v638
        %v641 = vunpack.c.l.s4 1934713408
        %v642 = vunpack.c.0.s8 %v641
        %v643 = vlaneseq
        %v644 = vshrl.u32 %v643, 7
        %v645 = vsub.s32 %v642, %v644
        %v646 = vrot.slane %v632, %v645
        %v647 = vcombine.high %v623, 0.0
        %v648 = vcombine.high %v630, 0.0
        %v649 = vcombine.high %v639, 0.0
        %v650 = vcombine.high %v646, 0.0
        %v651 = vcombine.low %v446, %v574
        %v652 = vcombine.high %v446, %v574
        %v654 = vunpack.c.l.s4 1983009808
        %v655 = vunpack.c.0.s8 %v654
        %v656 = vlaneseq
        %v657 = vshrl.u32 %v656, 7
        %v658 = vsub.s32 %v655, %v657
        %v659 = vrot.slane %v651, %v658
        %v661 = vunpack.c.l.s4 1983009808
        %v662 = vunpack.c.0.s8 %v661
        %v663 = vlaneseq
        %v664 = vshrl.u32 %v663, 7
        %v665 = vsub.s32 %v662, %v664
        %v666 = vrot.slane %v652, %v665
        %v667 = vcombine.low %v568, %v580
        %v668 = vcombine.high %v568, %v580
        %v670 = vunpack.c.l.s4 1983009808
        %v671 = vunpack.c.0.s8 %v670
        %v672 = vlaneseq
        %v673 = vshrl.u32 %v672, 7
        %v674 = vsub.s32 %v671, %v673
        %v675 = vrot.slane %v667, %v674
        %v677 = vunpack.c.l.s4 1983009808
        %v678 = vunpack.c.0.s8 %v677
        %v679 = vlaneseq
        %v680 = vshrl.u32 %v679, 7
        %v681 = vsub.s32 %v678, %v680
        %v682 = vrot.slane %v668, %v681
        %v683 = vcombine.low %v659, %v675
        %v684 = vcombine.high %v659, %v675
        %v686 = vunpack.c.l.s4 1934713408
        %v687 = vunpack.c.0.s8 %v686
        %v688 = vlaneseq
        %v689 = vshrl.u32 %v688, 7
        %v690 = vsub.s32 %v687, %v689
        %v691 = vrot.slane %v683, %v690
        %v693 = vunpack.c.l.s4 1934713408
        %v694 = vunpack.c.0.s8 %v693
        %v695 = vlaneseq
        %v696 = vshrl.u32 %v695, 7
        %v697 = vsub.s32 %v694, %v696
        %v698 = vrot.slane %v684, %v697
        %v699 = vcombine.low %v666, %v682
        %v700 = vcombine.high %v666, %v682
        %v702 = vunpack.c.l.s4 1934713408
        %v703 = vunpack.c.0.s8 %v702
        %v704 = vlaneseq
        %v705 = vshrl.u32 %v704, 7
        %v706 = vsub.s32 %v703, %v705
        %v707 = vrot.slane %v699, %v706
        %v709 = vunpack.c.l.s4 1934713408
        %v710 = vunpack.c.0.s8 %v709
        %v711 = vlaneseq
        %v712 = vshrl.u32 %v711, 7
        %v713 = vsub.s32 %v710, %v712
        %v714 = vrot.slane %v700, %v713
        %v715 = vcombine.high %v691, 0.0
        %v716 = vcombine.high %v698, 0.0
        %v717 = vcombine.high %v707, 0.0
        %v718 = vcombine.high %v714, 0.0
        %v719 = vcombine.low %v623, %v630
        %v721 = vunpack.c.l.s4 1983009808
        %v722 = vunpack.c.0.s8 %v721
        %v723 = vlaneseq
        %v724 = vshrl.u32 %v723, 7
        %v725 = vsub.s32 %v722, %v724
        %v726 = vrot.slane %v719, %v725
        %v727 = vcombine.low %v647, %v648
        %v729 = vunpack.c.l.s4 1983009808
        %v730 = vunpack.c.0.s8 %v729
        %v731 = vlaneseq
        %v732 = vshrl.u32 %v731, 7
        %v733 = vsub.s32 %v730, %v732
        %v734 = vrot.slane %v727, %v733
        %v735 = vcombine.low %v639, %v646
        %v737 = vunpack.c.l.s4 1983009808
        %v738 = vunpack.c.0.s8 %v737
        %v739 = vlaneseq
        %v740 = vshrl.u32 %v739, 7
        %v741 = vsub.s32 %v738, %v740
        %v742 = vrot.slane %v735, %v741
        %v743 = vcombine.low %v649, %v650
        %v745 = vunpack.c.l.s4 1983009808
        %v746 = vunpack.c.0.s8 %v745
        %v747 = vlaneseq
        %v748 = vshrl.u32 %v747, 7
        %v749 = vsub.s32 %v746, %v748
        %v750 = vrot.slane %v743, %v749
        %v751 = vcombine.low %v726, %v734
        %v752 = vcombine.high %v726, %v734
        %v754 = vunpack.c.l.s4 1934713408
        %v755 = vunpack.c.0.s8 %v754
        %v756 = vlaneseq
        %v757 = vshrl.u32 %v756, 7
        %v758 = vsub.s32 %v755, %v757
        %v759 = vrot.slane %v751, %v758
        %v761 = vunpack.c.l.s4 1934713408
        %v762 = vunpack.c.0.s8 %v761
        %v763 = vlaneseq
        %v764 = vshrl.u32 %v763, 7
        %v765 = vsub.s32 %v762, %v764
        %v766 = vrot.slane %v752, %v765
        %v767 = vcombine.low %v742, %v750
        %v768 = vcombine.high %v742, %v750
        %v770 = vunpack.c.l.s4 1934713408
        %v771 = vunpack.c.0.s8 %v770
        %v772 = vlaneseq
        %v773 = vshrl.u32 %v772, 7
        %v774 = vsub.s32 %v771, %v773
        %v775 = vrot.slane %v767, %v774
        %v777 = vunpack.c.l.s4 1934713408
        %v778 = vunpack.c.0.s8 %v777
        %v779 = vlaneseq
        %v780 = vshrl.u32 %v779, 7
        %v781 = vsub.s32 %v778, %v780
        %v782 = vrot.slane %v768, %v781
        %v783 = vcombine.low %v759, %v775
        %v784 = vcombine.high %v759, %v775
        %v785 = vcombine.low %v766, %v782
        %v786 = vcombine.high %v766, %v782
        %v787 = vcombine.low %v691, %v698
        %v789 = vunpack.c.l.s4 1983009808
        %v790 = vunpack.c.0.s8 %v789
        %v791 = vlaneseq
        %v792 = vshrl.u32 %v791, 7
        %v793 = vsub.s32 %v790, %v792
        %v794 = vrot.slane %v787, %v793
        %v795 = vcombine.low %v715, %v716
        %v797 = vunpack.c.l.s4 1983009808
        %v798 = vunpack.c.0.s8 %v797
        %v799 = vlaneseq
        %v800 = vshrl.u32 %v799, 7
        %v801 = vsub.s32 %v798, %v800
        %v802 = vrot.slane %v795, %v801
        %v803 = vcombine.low %v707, %v714
        %v805 = vunpack.c.l.s4 1983009808
        %v806 = vunpack.c.0.s8 %v805
        %v807 = vlaneseq
        %v808 = vshrl.u32 %v807, 7
        %v809 = vsub.s32 %v806, %v808
        %v810 = vrot.slane %v803, %v809
        %v811 = vcombine.low %v717, %v718
        %v813 = vunpack.c.l.s4 1983009808
        %v814 = vunpack.c.0.s8 %v813
        %v815 = vlaneseq
        %v816 = vshrl.u32 %v815, 7
        %v817 = vsub.s32 %v814, %v816
        %v818 = vrot.slane %v811, %v817
        %v819 = vcombine.low %v794, %v802
        %v820 = vcombine.high %v794, %v802
        %v822 = vunpack.c.l.s4 1934713408
        %v823 = vunpack.c.0.s8 %v822
        %v824 = vlaneseq
        %v825 = vshrl.u32 %v824, 7
        %v826 = vsub.s32 %v823, %v825
        %v827 = vrot.slane %v819, %v826
        %v829 = vunpack.c.l.s4 1934713408
        %v830 = vunpack.c.0.s8 %v829
        %v831 = vlaneseq
        %v832 = vshrl.u32 %v831, 7
        %v833 = vsub.s32 %v830, %v832
        %v834 = vrot.slane %v820, %v833
        %v835 = vcombine.low %v810, %v818
        %v836 = vcombine.high %v810, %v818
        %v838 = vunpack.c.l.s4 1934713408
        %v839 = vunpack.c.0.s8 %v838
        %v840 = vlaneseq
        %v841 = vshrl.u32 %v840, 7
        %v842 = vsub.s32 %v839, %v841
        %v843 = vrot.slane %v835, %v842
        %v845 = vunpack.c.l.s4 1934713408
        %v846 = vunpack.c.0.s8 %v845
        %v847 = vlaneseq
        %v848 = vshrl.u32 %v847, 7
        %v849 = vsub.s32 %v846, %v848
        %v850 = vrot.slane %v836, %v849
        %v851 = vcombine.low %v827, %v843
        %v852 = vcombine.high %v827, %v843
        %v853 = vcombine.low %v834, %v850
        %v854 = vcombine.high %v834, %v850
        %v855 = vpack.c.bf16 %v851, %v783
        %v856 = vpack.c.bf16 %v852, %v784
        %v857 = vpack.c.bf16 %v853, %v785
        %v858 = vpack.c.bf16 %v854, %v786
        %v863 = vunpack.c.l.b16 %v855
        %v864 = vunpack.c.h.b16 %v855
        %v865 = vunpack.c.l.b16 %v856
        %v866 = vunpack.c.h.b16 %v856
        %v867 = vunpack.c.l.b16 %v857
        %v868 = vunpack.c.h.b16 %v857
        %v869 = vunpack.c.l.b16 %v858
        %v870 = vunpack.c.h.b16 %v858
        %v871 = vpack.c.b16 %v863, %v863
        %v872 = vpack.c.b16 %v864, %v864
        %v873 = vpack.c.b16 %v865, %v865
        %v874 = vpack.c.b16 %v866, %v866
        %v875 = vpack.c.b16 %v867, %v867
        %v876 = vpack.c.b16 %v868, %v868
        %v877 = vpack.c.b16 %v869, %v869
        %v878 = vpack.c.b16 %v870, %v870
        %vm887 = vcmask 60416
        %888 = vst.msk [vmem:[%s368] sm:$0xf] %vm887, %v871
        %889 = vst.msk [vmem:[%s368 + $0x4] sm:$0xf] %vm887, %v872
        %890 = vst.msk [vmem:[%s368 + $0x8] sm:$0xf] %vm887, %v873
        %891 = vst.msk [vmem:[%s368 + $0xc] sm:$0xf] %vm887, %v874
        %892 = vst.msk [vmem:[%s368 + $0x10] sm:$0xf] %vm887, %v875
        %893 = vst.msk [vmem:[%s368 + $0x14] sm:$0xf] %vm887, %v876
        %894 = vst.msk [vmem:[%s368 + $0x18] sm:$0xf] %vm887, %v877
        %895 = vst.msk [vmem:[%s368 + $0x1c] sm:$0xf] %vm887, %v878
        %898 = vrot.lane.b32.xlu0 %v500, 120
        %v899 = vpop.permute.xlu0 %898
        %900 = vrot.lane.b32.xlu0 %v503, 120
        %v901 = vpop.permute.xlu0 %900
        %904 = vrot.lane.b32.xlu0 %v500, 112
        %v905 = vpop.permute.xlu0 %904
        %906 = vrot.lane.b32.xlu0 %v503, 112
        %v907 = vpop.permute.xlu0 %906
        %910 = vrot.lane.b32.xlu0 %v500, 104
        %v911 = vpop.permute.xlu0 %910
        %912 = vrot.lane.b32.xlu0 %v503, 104
        %v913 = vpop.permute.xlu0 %912
        %v916 = vcombine.low %v500, %v905
        %v917 = vcombine.high %v500, %v905
        %v919 = vunpack.c.l.s4 1983009808
        %v920 = vunpack.c.0.s8 %v919
        %v921 = vlaneseq
        %v922 = vshrl.u32 %v921, 7
        %v923 = vsub.s32 %v920, %v922
        %v924 = vrot.slane %v916, %v923
        %v926 = vunpack.c.l.s4 1983009808
        %v927 = vunpack.c.0.s8 %v926
        %v928 = vlaneseq
        %v929 = vshrl.u32 %v928, 7
        %v930 = vsub.s32 %v927, %v929
        %v931 = vrot.slane %v917, %v930
        %v932 = vcombine.low %v899, %v911
        %v933 = vcombine.high %v899, %v911
        %v935 = vunpack.c.l.s4 1983009808
        %v936 = vunpack.c.0.s8 %v935
        %v937 = vlaneseq
        %v938 = vshrl.u32 %v937, 7
        %v939 = vsub.s32 %v936, %v938
        %v940 = vrot.slane %v932, %v939
        %v942 = vunpack.c.l.s4 1983009808
        %v943 = vunpack.c.0.s8 %v942
        %v944 = vlaneseq
        %v945 = vshrl.u32 %v944, 7
        %v946 = vsub.s32 %v943, %v945
        %v947 = vrot.slane %v933, %v946
        %v948 = vcombine.low %v924, %v940
        %v949 = vcombine.high %v924, %v940
        %v951 = vunpack.c.l.s4 1934713408
        %v952 = vunpack.c.0.s8 %v951
        %v953 = vlaneseq
        %v954 = vshrl.u32 %v953, 7
        %v955 = vsub.s32 %v952, %v954
        %v956 = vrot.slane %v948, %v955
        %v958 = vunpack.c.l.s4 1934713408
        %v959 = vunpack.c.0.s8 %v958
        %v960 = vlaneseq
        %v961 = vshrl.u32 %v960, 7
        %v962 = vsub.s32 %v959, %v961
        %v963 = vrot.slane %v949, %v962
        %v964 = vcombine.low %v931, %v947
        %v965 = vcombine.high %v931, %v947
        %v967 = vunpack.c.l.s4 1934713408
        %v968 = vunpack.c.0.s8 %v967
        %v969 = vlaneseq
        %v970 = vshrl.u32 %v969, 7
        %v971 = vsub.s32 %v968, %v970
        %v972 = vrot.slane %v964, %v971
        %v974 = vunpack.c.l.s4 1934713408
        %v975 = vunpack.c.0.s8 %v974
        %v976 = vlaneseq
        %v977 = vshrl.u32 %v976, 7
        %v978 = vsub.s32 %v975, %v977
        %v979 = vrot.slane %v965, %v978
        %v980 = vcombine.high %v956, 0.0
        %v981 = vcombine.high %v963, 0.0
        %v982 = vcombine.high %v972, 0.0
        %v983 = vcombine.high %v979, 0.0
        %v984 = vcombine.low %v503, %v907
        %v985 = vcombine.high %v503, %v907
        %v987 = vunpack.c.l.s4 1983009808
        %v988 = vunpack.c.0.s8 %v987
        %v989 = vlaneseq
        %v990 = vshrl.u32 %v989, 7
        %v991 = vsub.s32 %v988, %v990
        %v992 = vrot.slane %v984, %v991
        %v994 = vunpack.c.l.s4 1983009808
        %v995 = vunpack.c.0.s8 %v994
        %v996 = vlaneseq
        %v997 = vshrl.u32 %v996, 7
        %v998 = vsub.s32 %v995, %v997
        %v999 = vrot.slane %v985, %v998
        %v1000 = vcombine.low %v901, %v913
        %v1001 = vcombine.high %v901, %v913
        %v1003 = vunpack.c.l.s4 1983009808
        %v1004 = vunpack.c.0.s8 %v1003
        %v1005 = vlaneseq
        %v1006 = vshrl.u32 %v1005, 7
        %v1007 = vsub.s32 %v1004, %v1006
        %v1008 = vrot.slane %v1000, %v1007
        %v1010 = vunpack.c.l.s4 1983009808
        %v1011 = vunpack.c.0.s8 %v1010
        %v1012 = vlaneseq
        %v1013 = vshrl.u32 %v1012, 7
        %v1014 = vsub.s32 %v1011, %v1013
        %v1015 = vrot.slane %v1001, %v1014
        %v1016 = vcombine.low %v992, %v1008
        %v1017 = vcombine.high %v992, %v1008
        %v1019 = vunpack.c.l.s4 1934713408
        %v1020 = vunpack.c.0.s8 %v1019
        %v1021 = vlaneseq
        %v1022 = vshrl.u32 %v1021, 7
        %v1023 = vsub.s32 %v1020, %v1022
        %v1024 = vrot.slane %v1016, %v1023
        %v1026 = vunpack.c.l.s4 1934713408
        %v1027 = vunpack.c.0.s8 %v1026
        %v1028 = vlaneseq
        %v1029 = vshrl.u32 %v1028, 7
        %v1030 = vsub.s32 %v1027, %v1029
        %v1031 = vrot.slane %v1017, %v1030
        %v1032 = vcombine.low %v999, %v1015
        %v1033 = vcombine.high %v999, %v1015
        %v1035 = vunpack.c.l.s4 1934713408
        %v1036 = vunpack.c.0.s8 %v1035
        %v1037 = vlaneseq
        %v1038 = vshrl.u32 %v1037, 7
        %v1039 = vsub.s32 %v1036, %v1038
        %v1040 = vrot.slane %v1032, %v1039
        %v1042 = vunpack.c.l.s4 1934713408
        %v1043 = vunpack.c.0.s8 %v1042
        %v1044 = vlaneseq
        %v1045 = vshrl.u32 %v1044, 7
        %v1046 = vsub.s32 %v1043, %v1045
        %v1047 = vrot.slane %v1033, %v1046
        %v1048 = vcombine.high %v1024, 0.0
        %v1049 = vcombine.high %v1031, 0.0
        %v1050 = vcombine.high %v1040, 0.0
        %v1051 = vcombine.high %v1047, 0.0
        %1052 = vxpose.xlu0.b32.start [1/16] %v956, 128
        %1053 = vxpose.xlu0.b32.cont [2/16] 0.0, 128
        %1054 = vxpose.xlu0.b32.cont [3/16] 0.0, 128
        %1055 = vxpose.xlu0.b32.cont [4/16] 0.0, 128
        %1056 = vxpose.xlu0.b32.cont [5/16] 0.0, 128
        %1057 = vxpose.xlu0.b32.cont [6/16] 0.0, 128
        %1058 = vxpose.xlu0.b32.cont [7/16] 0.0, 128
        %1059 = vxpose.xlu0.b32.cont [8/16] 0.0, 128
        %1060 = vxpose.xlu0.b32.cont [9/16] 0.0, 128
        %1061 = vxpose.xlu0.b32.cont [10/16] 0.0, 128
        %1062 = vxpose.xlu0.b32.cont [11/16] 0.0, 128
        %1063 = vxpose.xlu0.b32.cont [12/16] 0.0, 128
        %1064 = vxpose.xlu0.b32.cont [13/16] 0.0, 128
        %1065 = vxpose.xlu0.b32.cont [14/16] 0.0, 128
        %1066 = vxpose.xlu0.b32.cont [15/16] 0.0, 128
        %1067 = vxpose.xlu0.b32.end [16/16] 0.0, 128
        %v1068 = vpop.trf.xlu0
        %v1069 = vpop.trf.xlu0
        %v1070 = vpop.trf.xlu0
        %v1071 = vpop.trf.xlu0
        %v1072 = vpop.trf.xlu0
        %v1073 = vpop.trf.xlu0
        %v1074 = vpop.trf.xlu0
        %v1075 = vpop.trf.xlu0
        %v1076 = vpop.trf.xlu0
        %v1077 = vpop.trf.xlu0
        %v1078 = vpop.trf.xlu0
        %v1079 = vpop.trf.xlu0
        %v1080 = vpop.trf.xlu0
        %v1081 = vpop.trf.xlu0
        %v1082 = vpop.trf.xlu0
        %v1083 = vpop.trf.xlu0
        %1084 = vxpose.xlu0.b32.start [1/16] %v980, 128
        %1085 = vxpose.xlu0.b32.cont [2/16] 0.0, 128
        %1086 = vxpose.xlu0.b32.cont [3/16] 0.0, 128
        %1087 = vxpose.xlu0.b32.cont [4/16] 0.0, 128
        %1088 = vxpose.xlu0.b32.cont [5/16] 0.0, 128
        %1089 = vxpose.xlu0.b32.cont [6/16] 0.0, 128
        %1090 = vxpose.xlu0.b32.cont [7/16] 0.0, 128
        %1091 = vxpose.xlu0.b32.cont [8/16] 0.0, 128
        %1092 = vxpose.xlu0.b32.cont [9/16] 0.0, 128
        %1093 = vxpose.xlu0.b32.cont [10/16] 0.0, 128
        %1094 = vxpose.xlu0.b32.cont [11/16] 0.0, 128
        %1095 = vxpose.xlu0.b32.cont [12/16] 0.0, 128
        %1096 = vxpose.xlu0.b32.cont [13/16] 0.0, 128
        %1097 = vxpose.xlu0.b32.cont [14/16] 0.0, 128
        %1098 = vxpose.xlu0.b32.cont [15/16] 0.0, 128
        %1099 = vxpose.xlu0.b32.end [16/16] 0.0, 128
        %v1100 = vpop.trf.xlu0
        %v1101 = vpop.trf.xlu0
        %v1102 = vpop.trf.xlu0
        %v1103 = vpop.trf.xlu0
        %v1104 = vpop.trf.xlu0
        %v1105 = vpop.trf.xlu0
        %v1106 = vpop.trf.xlu0
        %v1107 = vpop.trf.xlu0
        %v1108 = vpop.trf.xlu0
        %v1109 = vpop.trf.xlu0
        %v1110 = vpop.trf.xlu0
        %v1111 = vpop.trf.xlu0
        %v1112 = vpop.trf.xlu0
        %v1113 = vpop.trf.xlu0
        %v1114 = vpop.trf.xlu0
        %v1115 = vpop.trf.xlu0
        %1116 = vxpose.xlu0.b32.start [1/16] %v963, 128
        %1117 = vxpose.xlu0.b32.cont [2/16] 0.0, 128
        %1118 = vxpose.xlu0.b32.cont [3/16] 0.0, 128
        %1119 = vxpose.xlu0.b32.cont [4/16] 0.0, 128
        %1120 = vxpose.xlu0.b32.cont [5/16] 0.0, 128
        %1121 = vxpose.xlu0.b32.cont [6/16] 0.0, 128
        %1122 = vxpose.xlu0.b32.cont [7/16] 0.0, 128
        %1123 = vxpose.xlu0.b32.cont [8/16] 0.0, 128
        %1124 = vxpose.xlu0.b32.cont [9/16] 0.0, 128
        %1125 = vxpose.xlu0.b32.cont [10/16] 0.0, 128
        %1126 = vxpose.xlu0.b32.cont [11/16] 0.0, 128
        %1127 = vxpose.xlu0.b32.cont [12/16] 0.0, 128
        %1128 = vxpose.xlu0.b32.cont [13/16] 0.0, 128
        %1129 = vxpose.xlu0.b32.cont [14/16] 0.0, 128
        %1130 = vxpose.xlu0.b32.cont [15/16] 0.0, 128
        %1131 = vxpose.xlu0.b32.end [16/16] 0.0, 128
        %v1132 = vpop.trf.xlu0
        %v1133 = vpop.trf.xlu0
        %v1134 = vpop.trf.xlu0
        %v1135 = vpop.trf.xlu0
        %v1136 = vpop.trf.xlu0
        %v1137 = vpop.trf.xlu0
        %v1138 = vpop.trf.xlu0
        %v1139 = vpop.trf.xlu0
        %v1140 = vpop.trf.xlu0
        %v1141 = vpop.trf.xlu0
        %v1142 = vpop.trf.xlu0
        %v1143 = vpop.trf.xlu0
        %v1144 = vpop.trf.xlu0
        %v1145 = vpop.trf.xlu0
        %v1146 = vpop.trf.xlu0
        %v1147 = vpop.trf.xlu0
        %1148 = vxpose.xlu0.b32.start [1/16] %v981, 128
        %1149 = vxpose.xlu0.b32.cont [2/16] 0.0, 128
        %1150 = vxpose.xlu0.b32.cont [3/16] 0.0, 128
        %1151 = vxpose.xlu0.b32.cont [4/16] 0.0, 128
        %1152 = vxpose.xlu0.b32.cont [5/16] 0.0, 128
        %1153 = vxpose.xlu0.b32.cont [6/16] 0.0, 128
        %1154 = vxpose.xlu0.b32.cont [7/16] 0.0, 128
        %1155 = vxpose.xlu0.b32.cont [8/16] 0.0, 128
        %1156 = vxpose.xlu0.b32.cont [9/16] 0.0, 128
        %1157 = vxpose.xlu0.b32.cont [10/16] 0.0, 128
        %1158 = vxpose.xlu0.b32.cont [11/16] 0.0, 128
        %1159 = vxpose.xlu0.b32.cont [12/16] 0.0, 128
        %1160 = vxpose.xlu0.b32.cont [13/16] 0.0, 128
        %1161 = vxpose.xlu0.b32.cont [14/16] 0.0, 128
        %1162 = vxpose.xlu0.b32.cont [15/16] 0.0, 128
        %1163 = vxpose.xlu0.b32.end [16/16] 0.0, 128
        %v1164 = vpop.trf.xlu0
        %v1165 = vpop.trf.xlu0
        %v1166 = vpop.trf.xlu0
        %v1167 = vpop.trf.xlu0
        %v1168 = vpop.trf.xlu0
        %v1169 = vpop.trf.xlu0
        %v1170 = vpop.trf.xlu0
        %v1171 = vpop.trf.xlu0
        %v1172 = vpop.trf.xlu0
        %v1173 = vpop.trf.xlu0
        %v1174 = vpop.trf.xlu0
        %v1175 = vpop.trf.xlu0
        %v1176 = vpop.trf.xlu0
        %v1177 = vpop.trf.xlu0
        %v1178 = vpop.trf.xlu0
        %v1179 = vpop.trf.xlu0
        %1180 = vxpose.xlu0.b32.start [1/16] %v972, 128
        %1181 = vxpose.xlu0.b32.cont [2/16] 0.0, 128
        %1182 = vxpose.xlu0.b32.cont [3/16] 0.0, 128
        %1183 = vxpose.xlu0.b32.cont [4/16] 0.0, 128
        %1184 = vxpose.xlu0.b32.cont [5/16] 0.0, 128
        %1185 = vxpose.xlu0.b32.cont [6/16] 0.0, 128
        %1186 = vxpose.xlu0.b32.cont [7/16] 0.0, 128
        %1187 = vxpose.xlu0.b32.cont [8/16] 0.0, 128
        %1188 = vxpose.xlu0.b32.cont [9/16] 0.0, 128
        %1189 = vxpose.xlu0.b32.cont [10/16] 0.0, 128
        %1190 = vxpose.xlu0.b32.cont [11/16] 0.0, 128
        %1191 = vxpose.xlu0.b32.cont [12/16] 0.0, 128
        %1192 = vxpose.xlu0.b32.cont [13/16] 0.0, 128
        %1193 = vxpose.xlu0.b32.cont [14/16] 0.0, 128
        %1194 = vxpose.xlu0.b32.cont [15/16] 0.0, 128
        %1195 = vxpose.xlu0.b32.end [16/16] 0.0, 128
        %v1196 = vpop.trf.xlu0
        %v1197 = vpop.trf.xlu0
        %v1198 = vpop.trf.xlu0
        %v1199 = vpop.trf.xlu0
        %v1200 = vpop.trf.xlu0
        %v1201 = vpop.trf.xlu0
        %v1202 = vpop.trf.xlu0
        %v1203 = vpop.trf.xlu0
        %v1204 = vpop.trf.xlu0
        %v1205 = vpop.trf.xlu0
        %v1206 = vpop.trf.xlu0
        %v1207 = vpop.trf.xlu0
        %v1208 = vpop.trf.xlu0
        %v1209 = vpop.trf.xlu0
        %v1210 = vpop.trf.xlu0
        %v1211 = vpop.trf.xlu0
        %1212 = vxpose.xlu0.b32.start [1/16] %v982, 128
        %1213 = vxpose.xlu0.b32.cont [2/16] 0.0, 128
        %1214 = vxpose.xlu0.b32.cont [3/16] 0.0, 128
        %1215 = vxpose.xlu0.b32.cont [4/16] 0.0, 128
        %1216 = vxpose.xlu0.b32.cont [5/16] 0.0, 128
        %1217 = vxpose.xlu0.b32.cont [6/16] 0.0, 128
        %1218 = vxpose.xlu0.b32.cont [7/16] 0.0, 128
        %1219 = vxpose.xlu0.b32.cont [8/16] 0.0, 128
        %1220 = vxpose.xlu0.b32.cont [9/16] 0.0, 128
        %1221 = vxpose.xlu0.b32.cont [10/16] 0.0, 128
        %1222 = vxpose.xlu0.b32.cont [11/16] 0.0, 128
        %1223 = vxpose.xlu0.b32.cont [12/16] 0.0, 128
        %1224 = vxpose.xlu0.b32.cont [13/16] 0.0, 128
        %1225 = vxpose.xlu0.b32.cont [14/16] 0.0, 128
        %1226 = vxpose.xlu0.b32.cont [15/16] 0.0, 128
        %1227 = vxpose.xlu0.b32.end [16/16] 0.0, 128
        %v1228 = vpop.trf.xlu0
        %v1229 = vpop.trf.xlu0
        %v1230 = vpop.trf.xlu0
        %v1231 = vpop.trf.xlu0
        %v1232 = vpop.trf.xlu0
        %v1233 = vpop.trf.xlu0
        %v1234 = vpop.trf.xlu0
        %v1235 = vpop.trf.xlu0
        %v1236 = vpop.trf.xlu0
        %v1237 = vpop.trf.xlu0
        %v1238 = vpop.trf.xlu0
        %v1239 = vpop.trf.xlu0
        %v1240 = vpop.trf.xlu0
        %v1241 = vpop.trf.xlu0
        %v1242 = vpop.trf.xlu0
        %v1243 = vpop.trf.xlu0
        %1244 = vxpose.xlu0.b32.start [1/16] %v979, 128
        %1245 = vxpose.xlu0.b32.cont [2/16] 0.0, 128
        %1246 = vxpose.xlu0.b32.cont [3/16] 0.0, 128
        %1247 = vxpose.xlu0.b32.cont [4/16] 0.0, 128
        %1248 = vxpose.xlu0.b32.cont [5/16] 0.0, 128
        %1249 = vxpose.xlu0.b32.cont [6/16] 0.0, 128
        %1250 = vxpose.xlu0.b32.cont [7/16] 0.0, 128
        %1251 = vxpose.xlu0.b32.cont [8/16] 0.0, 128
        %1252 = vxpose.xlu0.b32.cont [9/16] 0.0, 128
        %1253 = vxpose.xlu0.b32.cont [10/16] 0.0, 128
        %1254 = vxpose.xlu0.b32.cont [11/16] 0.0, 128
        %1255 = vxpose.xlu0.b32.cont [12/16] 0.0, 128
        %1256 = vxpose.xlu0.b32.cont [13/16] 0.0, 128
        %1257 = vxpose.xlu0.b32.cont [14/16] 0.0, 128
        %1258 = vxpose.xlu0.b32.cont [15/16] 0.0, 128
        %1259 = vxpose.xlu0.b32.end [16/16] 0.0, 128
        %v1260 = vpop.trf.xlu0
        %v1261 = vpop.trf.xlu0
        %v1262 = vpop.trf.xlu0
        %v1263 = vpop.trf.xlu0
        %v1264 = vpop.trf.xlu0
        %v1265 = vpop.trf.xlu0
        %v1266 = vpop.trf.xlu0
        %v1267 = vpop.trf.xlu0
        %v1268 = vpop.trf.xlu0
        %v1269 = vpop.trf.xlu0
        %v1270 = vpop.trf.xlu0
        %v1271 = vpop.trf.xlu0
        %v1272 = vpop.trf.xlu0
        %v1273 = vpop.trf.xlu0
        %v1274 = vpop.trf.xlu0
        %v1275 = vpop.trf.xlu0
        %1276 = vxpose.xlu0.b32.start [1/16] %v983, 128
        %1277 = vxpose.xlu0.b32.cont [2/16] 0.0, 128
        %1278 = vxpose.xlu0.b32.cont [3/16] 0.0, 128
        %1279 = vxpose.xlu0.b32.cont [4/16] 0.0, 128
        %1280 = vxpose.xlu0.b32.cont [5/16] 0.0, 128
        %1281 = vxpose.xlu0.b32.cont [6/16] 0.0, 128
        %1282 = vxpose.xlu0.b32.cont [7/16] 0.0, 128
        %1283 = vxpose.xlu0.b32.cont [8/16] 0.0, 128
        %1284 = vxpose.xlu0.b32.cont [9/16] 0.0, 128
        %1285 = vxpose.xlu0.b32.cont [10/16] 0.0, 128
        %1286 = vxpose.xlu0.b32.cont [11/16] 0.0, 128
        %1287 = vxpose.xlu0.b32.cont [12/16] 0.0, 128
        %1288 = vxpose.xlu0.b32.cont [13/16] 0.0, 128
        %1289 = vxpose.xlu0.b32.cont [14/16] 0.0, 128
        %1290 = vxpose.xlu0.b32.cont [15/16] 0.0, 128
        %1291 = vxpose.xlu0.b32.end [16/16] 0.0, 128
        %v1292 = vpop.trf.xlu0
        %v1293 = vpop.trf.xlu0
        %v1294 = vpop.trf.xlu0
        %v1295 = vpop.trf.xlu0
        %v1296 = vpop.trf.xlu0
        %v1297 = vpop.trf.xlu0
        %v1298 = vpop.trf.xlu0
        %v1299 = vpop.trf.xlu0
        %v1300 = vpop.trf.xlu0
        %v1301 = vpop.trf.xlu0
        %v1302 = vpop.trf.xlu0
        %v1303 = vpop.trf.xlu0
        %v1304 = vpop.trf.xlu0
        %v1305 = vpop.trf.xlu0
        %v1306 = vpop.trf.xlu0
        %v1307 = vpop.trf.xlu0
        %1308 = vxpose.xlu0.b32.start [1/16] %v1024, 128
        %1309 = vxpose.xlu0.b32.cont [2/16] 0.0, 128
        %1310 = vxpose.xlu0.b32.cont [3/16] 0.0, 128
        %1311 = vxpose.xlu0.b32.cont [4/16] 0.0, 128
        %1312 = vxpose.xlu0.b32.cont [5/16] 0.0, 128
        %1313 = vxpose.xlu0.b32.cont [6/16] 0.0, 128
        %1314 = vxpose.xlu0.b32.cont [7/16] 0.0, 128
        %1315 = vxpose.xlu0.b32.cont [8/16] 0.0, 128
        %1316 = vxpose.xlu0.b32.cont [9/16] 0.0, 128
        %1317 = vxpose.xlu0.b32.cont [10/16] 0.0, 128
        %1318 = vxpose.xlu0.b32.cont [11/16] 0.0, 128
        %1319 = vxpose.xlu0.b32.cont [12/16] 0.0, 128
        %1320 = vxpose.xlu0.b32.cont [13/16] 0.0, 128
        %1321 = vxpose.xlu0.b32.cont [14/16] 0.0, 128
        %1322 = vxpose.xlu0.b32.cont [15/16] 0.0, 128
        %1323 = vxpose.xlu0.b32.end [16/16] 0.0, 128
        %v1324 = vpop.trf.xlu0
        %v1325 = vpop.trf.xlu0
        %v1326 = vpop.trf.xlu0
        %v1327 = vpop.trf.xlu0
        %v1328 = vpop.trf.xlu0
        %v1329 = vpop.trf.xlu0
        %v1330 = vpop.trf.xlu0
        %v1331 = vpop.trf.xlu0
        %v1332 = vpop.trf.xlu0
        %v1333 = vpop.trf.xlu0
        %v1334 = vpop.trf.xlu0
        %v1335 = vpop.trf.xlu0
        %v1336 = vpop.trf.xlu0
        %v1337 = vpop.trf.xlu0
        %v1338 = vpop.trf.xlu0
        %v1339 = vpop.trf.xlu0
        %1340 = vxpose.xlu0.b32.start [1/16] %v1048, 128
        %1341 = vxpose.xlu0.b32.cont [2/16] 0.0, 128
        %1342 = vxpose.xlu0.b32.cont [3/16] 0.0, 128
        %1343 = vxpose.xlu0.b32.cont [4/16] 0.0, 128
        %1344 = vxpose.xlu0.b32.cont [5/16] 0.0, 128
        %1345 = vxpose.xlu0.b32.cont [6/16] 0.0, 128
        %1346 = vxpose.xlu0.b32.cont [7/16] 0.0, 128
        %1347 = vxpose.xlu0.b32.cont [8/16] 0.0, 128
        %1348 = vxpose.xlu0.b32.cont [9/16] 0.0, 128
        %1349 = vxpose.xlu0.b32.cont [10/16] 0.0, 128
        %1350 = vxpose.xlu0.b32.cont [11/16] 0.0, 128
        %1351 = vxpose.xlu0.b32.cont [12/16] 0.0, 128
        %1352 = vxpose.xlu0.b32.cont [13/16] 0.0, 128
        %1353 = vxpose.xlu0.b32.cont [14/16] 0.0, 128
        %1354 = vxpose.xlu0.b32.cont [15/16] 0.0, 128
        %1355 = vxpose.xlu0.b32.end [16/16] 0.0, 128
        %v1356 = vpop.trf.xlu0
        %v1357 = vpop.trf.xlu0
        %v1358 = vpop.trf.xlu0
        %v1359 = vpop.trf.xlu0
        %v1360 = vpop.trf.xlu0
        %v1361 = vpop.trf.xlu0
        %v1362 = vpop.trf.xlu0
        %v1363 = vpop.trf.xlu0
        %v1364 = vpop.trf.xlu0
        %v1365 = vpop.trf.xlu0
        %v1366 = vpop.trf.xlu0
        %v1367 = vpop.trf.xlu0
        %v1368 = vpop.trf.xlu0
        %v1369 = vpop.trf.xlu0
        %v1370 = vpop.trf.xlu0
        %v1371 = vpop.trf.xlu0
        %1372 = vxpose.xlu0.b32.start [1/16] %v1031, 128
        %1373 = vxpose.xlu0.b32.cont [2/16] 0.0, 128
        %1374 = vxpose.xlu0.b32.cont [3/16] 0.0, 128
        %1375 = vxpose.xlu0.b32.cont [4/16] 0.0, 128
        %1376 = vxpose.xlu0.b32.cont [5/16] 0.0, 128
        %1377 = vxpose.xlu0.b32.cont [6/16] 0.0, 128
        %1378 = vxpose.xlu0.b32.cont [7/16] 0.0, 128
        %1379 = vxpose.xlu0.b32.cont [8/16] 0.0, 128
        %1380 = vxpose.xlu0.b32.cont [9/16] 0.0, 128
        %1381 = vxpose.xlu0.b32.cont [10/16] 0.0, 128
        %1382 = vxpose.xlu0.b32.cont [11/16] 0.0, 128
        %1383 = vxpose.xlu0.b32.cont [12/16] 0.0, 128
        %1384 = vxpose.xlu0.b32.cont [13/16] 0.0, 128
        %1385 = vxpose.xlu0.b32.cont [14/16] 0.0, 128
        %1386 = vxpose.xlu0.b32.cont [15/16] 0.0, 128
        %1387 = vxpose.xlu0.b32.end [16/16] 0.0, 128
        %v1388 = vpop.trf.xlu0
        %v1389 = vpop.trf.xlu0
        %v1390 = vpop.trf.xlu0
        %v1391 = vpop.trf.xlu0
        %v1392 = vpop.trf.xlu0
        %v1393 = vpop.trf.xlu0
        %v1394 = vpop.trf.xlu0
        %v1395 = vpop.trf.xlu0
        %v1396 = vpop.trf.xlu0
        %v1397 = vpop.trf.xlu0
        %v1398 = vpop.trf.xlu0
        %v1399 = vpop.trf.xlu0
        %v1400 = vpop.trf.xlu0
        %v1401 = vpop.trf.xlu0
        %v1402 = vpop.trf.xlu0
        %v1403 = vpop.trf.xlu0
        %1404 = vxpose.xlu0.b32.start [1/16] %v1049, 128
        %1405 = vxpose.xlu0.b32.cont [2/16] 0.0, 128
        %1406 = vxpose.xlu0.b32.cont [3/16] 0.0, 128
        %1407 = vxpose.xlu0.b32.cont [4/16] 0.0, 128
        %1408 = vxpose.xlu0.b32.cont [5/16] 0.0, 128
        %1409 = vxpose.xlu0.b32.cont [6/16] 0.0, 128
        %1410 = vxpose.xlu0.b32.cont [7/16] 0.0, 128
        %1411 = vxpose.xlu0.b32.cont [8/16] 0.0, 128
        %1412 = vxpose.xlu0.b32.cont [9/16] 0.0, 128
        %1413 = vxpose.xlu0.b32.cont [10/16] 0.0, 128
        %1414 = vxpose.xlu0.b32.cont [11/16] 0.0, 128
        %1415 = vxpose.xlu0.b32.cont [12/16] 0.0, 128
        %1416 = vxpose.xlu0.b32.cont [13/16] 0.0, 128
        %1417 = vxpose.xlu0.b32.cont [14/16] 0.0, 128
        %1418 = vxpose.xlu0.b32.cont [15/16] 0.0, 128
        %1419 = vxpose.xlu0.b32.end [16/16] 0.0, 128
        %v1420 = vpop.trf.xlu0
        %v1421 = vpop.trf.xlu0
        %v1422 = vpop.trf.xlu0
        %v1423 = vpop.trf.xlu0
        %v1424 = vpop.trf.xlu0
        %v1425 = vpop.trf.xlu0
        %v1426 = vpop.trf.xlu0
        %v1427 = vpop.trf.xlu0
        %v1428 = vpop.trf.xlu0
        %v1429 = vpop.trf.xlu0
        %v1430 = vpop.trf.xlu0
        %v1431 = vpop.trf.xlu0
        %v1432 = vpop.trf.xlu0
        %v1433 = vpop.trf.xlu0
        %v1434 = vpop.trf.xlu0
        %v1435 = vpop.trf.xlu0
        %1436 = vxpose.xlu0.b32.start [1/16] %v1040, 128
        %1437 = vxpose.xlu0.b32.cont [2/16] 0.0, 128
        %1438 = vxpose.xlu0.b32.cont [3/16] 0.0, 128
        %1439 = vxpose.xlu0.b32.cont [4/16] 0.0, 128
        %1440 = vxpose.xlu0.b32.cont [5/16] 0.0, 128
        %1441 = vxpose.xlu0.b32.cont [6/16] 0.0, 128
        %1442 = vxpose.xlu0.b32.cont [7/16] 0.0, 128
        %1443 = vxpose.xlu0.b32.cont [8/16] 0.0, 128
        %1444 = vxpose.xlu0.b32.cont [9/16] 0.0, 128
        %1445 = vxpose.xlu0.b32.cont [10/16] 0.0, 128
        %1446 = vxpose.xlu0.b32.cont [11/16] 0.0, 128
        %1447 = vxpose.xlu0.b32.cont [12/16] 0.0, 128
        %1448 = vxpose.xlu0.b32.cont [13/16] 0.0, 128
        %1449 = vxpose.xlu0.b32.cont [14/16] 0.0, 128
        %1450 = vxpose.xlu0.b32.cont [15/16] 0.0, 128
        %1451 = vxpose.xlu0.b32.end [16/16] 0.0, 128
        %v1452 = vpop.trf.xlu0
        %v1453 = vpop.trf.xlu0
        %v1454 = vpop.trf.xlu0
        %v1455 = vpop.trf.xlu0
        %v1456 = vpop.trf.xlu0
        %v1457 = vpop.trf.xlu0
        %v1458 = vpop.trf.xlu0
        %v1459 = vpop.trf.xlu0
        %v1460 = vpop.trf.xlu0
        %v1461 = vpop.trf.xlu0
        %v1462 = vpop.trf.xlu0
        %v1463 = vpop.trf.xlu0
        %v1464 = vpop.trf.xlu0
        %v1465 = vpop.trf.xlu0
        %v1466 = vpop.trf.xlu0
        %v1467 = vpop.trf.xlu0
        %1468 = vxpose.xlu0.b32.start [1/16] %v1050, 128
        %1469 = vxpose.xlu0.b32.cont [2/16] 0.0, 128
        %1470 = vxpose.xlu0.b32.cont [3/16] 0.0, 128
        %1471 = vxpose.xlu0.b32.cont [4/16] 0.0, 128
        %1472 = vxpose.xlu0.b32.cont [5/16] 0.0, 128
        %1473 = vxpose.xlu0.b32.cont [6/16] 0.0, 128
        %1474 = vxpose.xlu0.b32.cont [7/16] 0.0, 128
        %1475 = vxpose.xlu0.b32.cont [8/16] 0.0, 128
        %1476 = vxpose.xlu0.b32.cont [9/16] 0.0, 128
        %1477 = vxpose.xlu0.b32.cont [10/16] 0.0, 128
        %1478 = vxpose.xlu0.b32.cont [11/16] 0.0, 128
        %1479 = vxpose.xlu0.b32.cont [12/16] 0.0, 128
        %1480 = vxpose.xlu0.b32.cont [13/16] 0.0, 128
        %1481 = vxpose.xlu0.b32.cont [14/16] 0.0, 128
        %1482 = vxpose.xlu0.b32.cont [15/16] 0.0, 128
        %1483 = vxpose.xlu0.b32.end [16/16] 0.0, 128
        %v1484 = vpop.trf.xlu0
        %v1485 = vpop.trf.xlu0
        %v1486 = vpop.trf.xlu0
        %v1487 = vpop.trf.xlu0
        %v1488 = vpop.trf.xlu0
        %v1489 = vpop.trf.xlu0
        %v1490 = vpop.trf.xlu0
        %v1491 = vpop.trf.xlu0
        %v1492 = vpop.trf.xlu0
        %v1493 = vpop.trf.xlu0
        %v1494 = vpop.trf.xlu0
        %v1495 = vpop.trf.xlu0
        %v1496 = vpop.trf.xlu0
        %v1497 = vpop.trf.xlu0
        %v1498 = vpop.trf.xlu0
        %v1499 = vpop.trf.xlu0
        %1500 = vxpose.xlu0.b32.start [1/16] %v1047, 128
        %1501 = vxpose.xlu0.b32.cont [2/16] 0.0, 128
        %1502 = vxpose.xlu0.b32.cont [3/16] 0.0, 128
        %1503 = vxpose.xlu0.b32.cont [4/16] 0.0, 128
        %1504 = vxpose.xlu0.b32.cont [5/16] 0.0, 128
        %1505 = vxpose.xlu0.b32.cont [6/16] 0.0, 128
        %1506 = vxpose.xlu0.b32.cont [7/16] 0.0, 128
        %1507 = vxpose.xlu0.b32.cont [8/16] 0.0, 128
        %1508 = vxpose.xlu0.b32.cont [9/16] 0.0, 128
        %1509 = vxpose.xlu0.b32.cont [10/16] 0.0, 128
        %1510 = vxpose.xlu0.b32.cont [11/16] 0.0, 128
        %1511 = vxpose.xlu0.b32.cont [12/16] 0.0, 128
        %1512 = vxpose.xlu0.b32.cont [13/16] 0.0, 128
        %1513 = vxpose.xlu0.b32.cont [14/16] 0.0, 128
        %1514 = vxpose.xlu0.b32.cont [15/16] 0.0, 128
        %1515 = vxpose.xlu0.b32.end [16/16] 0.0, 128
        %v1516 = vpop.trf.xlu0
        %v1517 = vpop.trf.xlu0
        %v1518 = vpop.trf.xlu0
        %v1519 = vpop.trf.xlu0
        %v1520 = vpop.trf.xlu0
        %v1521 = vpop.trf.xlu0
        %v1522 = vpop.trf.xlu0
        %v1523 = vpop.trf.xlu0
        %v1524 = vpop.trf.xlu0
        %v1525 = vpop.trf.xlu0
        %v1526 = vpop.trf.xlu0
        %v1527 = vpop.trf.xlu0
        %v1528 = vpop.trf.xlu0
        %v1529 = vpop.trf.xlu0
        %v1530 = vpop.trf.xlu0
        %v1531 = vpop.trf.xlu0
        %1532 = vxpose.xlu0.b32.start [1/16] %v1051, 128
        %1533 = vxpose.xlu0.b32.cont [2/16] 0.0, 128
        %1534 = vxpose.xlu0.b32.cont [3/16] 0.0, 128
        %1535 = vxpose.xlu0.b32.cont [4/16] 0.0, 128
        %1536 = vxpose.xlu0.b32.cont [5/16] 0.0, 128
        %1537 = vxpose.xlu0.b32.cont [6/16] 0.0, 128
        %1538 = vxpose.xlu0.b32.cont [7/16] 0.0, 128
        %1539 = vxpose.xlu0.b32.cont [8/16] 0.0, 128
        %1540 = vxpose.xlu0.b32.cont [9/16] 0.0, 128
        %1541 = vxpose.xlu0.b32.cont [10/16] 0.0, 128
        %1542 = vxpose.xlu0.b32.cont [11/16] 0.0, 128
        %1543 = vxpose.xlu0.b32.cont [12/16] 0.0, 128
        %1544 = vxpose.xlu0.b32.cont [13/16] 0.0, 128
        %1545 = vxpose.xlu0.b32.cont [14/16] 0.0, 128
        %1546 = vxpose.xlu0.b32.cont [15/16] 0.0, 128
        %1547 = vxpose.xlu0.b32.end [16/16] 0.0, 128
        %v1548 = vpop.trf.xlu0
        %v1549 = vpop.trf.xlu0
        %v1550 = vpop.trf.xlu0
        %v1551 = vpop.trf.xlu0
        %v1552 = vpop.trf.xlu0
        %v1553 = vpop.trf.xlu0
        %v1554 = vpop.trf.xlu0
        %v1555 = vpop.trf.xlu0
        %v1556 = vpop.trf.xlu0
        %v1557 = vpop.trf.xlu0
        %v1558 = vpop.trf.xlu0
        %v1559 = vpop.trf.xlu0
        %v1560 = vpop.trf.xlu0
        %v1561 = vpop.trf.xlu0
        %v1562 = vpop.trf.xlu0
        %v1563 = vpop.trf.xlu0
        %v1564 = vcombine.low %v1068, %v1132
        %v1565 = vcombine.high %v1068, %v1132
        %v1567 = vunpack.c.l.s4 1983009808
        %v1568 = vunpack.c.0.s8 %v1567
        %v1569 = vlaneseq
        %v1570 = vshrl.u32 %v1569, 7
        %v1571 = vsub.s32 %v1568, %v1570
        %v1572 = vrot.slane %v1564, %v1571
        %v1574 = vunpack.c.l.s4 1983009808
        %v1575 = vunpack.c.0.s8 %v1574
        %v1576 = vlaneseq
        %v1577 = vshrl.u32 %v1576, 7
        %v1578 = vsub.s32 %v1575, %v1577
        %v1579 = vrot.slane %v1565, %v1578
        %v1580 = vcombine.low %v1100, %v1164
        %v1581 = vcombine.high %v1100, %v1164
        %v1583 = vunpack.c.l.s4 1983009808
        %v1584 = vunpack.c.0.s8 %v1583
        %v1585 = vlaneseq
        %v1586 = vshrl.u32 %v1585, 7
        %v1587 = vsub.s32 %v1584, %v1586
        %v1588 = vrot.slane %v1580, %v1587
        %v1590 = vunpack.c.l.s4 1983009808
        %v1591 = vunpack.c.0.s8 %v1590
        %v1592 = vlaneseq
        %v1593 = vshrl.u32 %v1592, 7
        %v1594 = vsub.s32 %v1591, %v1593
        %v1595 = vrot.slane %v1581, %v1594
        %v1596 = vcombine.low %v1196, %v1260
        %v1597 = vcombine.high %v1196, %v1260
        %v1599 = vunpack.c.l.s4 1983009808
        %v1600 = vunpack.c.0.s8 %v1599
        %v1601 = vlaneseq
        %v1602 = vshrl.u32 %v1601, 7
        %v1603 = vsub.s32 %v1600, %v1602
        %v1604 = vrot.slane %v1596, %v1603
        %v1606 = vunpack.c.l.s4 1983009808
        %v1607 = vunpack.c.0.s8 %v1606
        %v1608 = vlaneseq
        %v1609 = vshrl.u32 %v1608, 7
        %v1610 = vsub.s32 %v1607, %v1609
        %v1611 = vrot.slane %v1597, %v1610
        %v1612 = vcombine.low %v1228, %v1292
        %v1613 = vcombine.high %v1228, %v1292
        %v1615 = vunpack.c.l.s4 1983009808
        %v1616 = vunpack.c.0.s8 %v1615
        %v1617 = vlaneseq
        %v1618 = vshrl.u32 %v1617, 7
        %v1619 = vsub.s32 %v1616, %v1618
        %v1620 = vrot.slane %v1612, %v1619
        %v1622 = vunpack.c.l.s4 1983009808
        %v1623 = vunpack.c.0.s8 %v1622
        %v1624 = vlaneseq
        %v1625 = vshrl.u32 %v1624, 7
        %v1626 = vsub.s32 %v1623, %v1625
        %v1627 = vrot.slane %v1613, %v1626
        %v1628 = vcombine.low %v1572, %v1588
        %v1629 = vcombine.high %v1572, %v1588
        %v1631 = vunpack.c.l.s4 1934713408
        %v1632 = vunpack.c.0.s8 %v1631
        %v1633 = vlaneseq
        %v1634 = vshrl.u32 %v1633, 7
        %v1635 = vsub.s32 %v1632, %v1634
        %v1636 = vrot.slane %v1628, %v1635
        %v1638 = vunpack.c.l.s4 1934713408
        %v1639 = vunpack.c.0.s8 %v1638
        %v1640 = vlaneseq
        %v1641 = vshrl.u32 %v1640, 7
        %v1642 = vsub.s32 %v1639, %v1641
        %v1643 = vrot.slane %v1629, %v1642
        %v1644 = vcombine.low %v1579, %v1595
        %v1645 = vcombine.high %v1579, %v1595
        %v1647 = vunpack.c.l.s4 1934713408
        %v1648 = vunpack.c.0.s8 %v1647
        %v1649 = vlaneseq
        %v1650 = vshrl.u32 %v1649, 7
        %v1651 = vsub.s32 %v1648, %v1650
        %v1652 = vrot.slane %v1644, %v1651
        %v1654 = vunpack.c.l.s4 1934713408
        %v1655 = vunpack.c.0.s8 %v1654
        %v1656 = vlaneseq
        %v1657 = vshrl.u32 %v1656, 7
        %v1658 = vsub.s32 %v1655, %v1657
        %v1659 = vrot.slane %v1645, %v1658
        %v1660 = vcombine.low %v1604, %v1620
        %v1661 = vcombine.high %v1604, %v1620
        %v1663 = vunpack.c.l.s4 1934713408
        %v1664 = vunpack.c.0.s8 %v1663
        %v1665 = vlaneseq
        %v1666 = vshrl.u32 %v1665, 7
        %v1667 = vsub.s32 %v1664, %v1666
        %v1668 = vrot.slane %v1660, %v1667
        %v1670 = vunpack.c.l.s4 1934713408
        %v1671 = vunpack.c.0.s8 %v1670
        %v1672 = vlaneseq
        %v1673 = vshrl.u32 %v1672, 7
        %v1674 = vsub.s32 %v1671, %v1673
        %v1675 = vrot.slane %v1661, %v1674
        %v1676 = vcombine.low %v1611, %v1627
        %v1677 = vcombine.high %v1611, %v1627
        %v1679 = vunpack.c.l.s4 1934713408
        %v1680 = vunpack.c.0.s8 %v1679
        %v1681 = vlaneseq
        %v1682 = vshrl.u32 %v1681, 7
        %v1683 = vsub.s32 %v1680, %v1682
        %v1684 = vrot.slane %v1676, %v1683
        %v1686 = vunpack.c.l.s4 1934713408
        %v1687 = vunpack.c.0.s8 %v1686
        %v1688 = vlaneseq
        %v1689 = vshrl.u32 %v1688, 7
        %v1690 = vsub.s32 %v1687, %v1689
        %v1691 = vrot.slane %v1677, %v1690
        %v1692 = vcombine.low %v1636, %v1668
        %v1693 = vcombine.high %v1636, %v1668
        %v1694 = vcombine.low %v1643, %v1675
        %v1695 = vcombine.high %v1643, %v1675
        %v1696 = vcombine.low %v1652, %v1684
        %v1697 = vcombine.high %v1652, %v1684
        %v1698 = vcombine.low %v1659, %v1691
        %v1699 = vcombine.high %v1659, %v1691
        %v1700 = vcombine.low %v1324, %v1388
        %v1701 = vcombine.high %v1324, %v1388
        %v1703 = vunpack.c.l.s4 1983009808
        %v1704 = vunpack.c.0.s8 %v1703
        %v1705 = vlaneseq
        %v1706 = vshrl.u32 %v1705, 7
        %v1707 = vsub.s32 %v1704, %v1706
        %v1708 = vrot.slane %v1700, %v1707
        %v1710 = vunpack.c.l.s4 1983009808
        %v1711 = vunpack.c.0.s8 %v1710
        %v1712 = vlaneseq
        %v1713 = vshrl.u32 %v1712, 7
        %v1714 = vsub.s32 %v1711, %v1713
        %v1715 = vrot.slane %v1701, %v1714
        %v1716 = vcombine.low %v1356, %v1420
        %v1717 = vcombine.high %v1356, %v1420
        %v1719 = vunpack.c.l.s4 1983009808
        %v1720 = vunpack.c.0.s8 %v1719
        %v1721 = vlaneseq
        %v1722 = vshrl.u32 %v1721, 7
        %v1723 = vsub.s32 %v1720, %v1722
        %v1724 = vrot.slane %v1716, %v1723
        %v1726 = vunpack.c.l.s4 1983009808
        %v1727 = vunpack.c.0.s8 %v1726
        %v1728 = vlaneseq
        %v1729 = vshrl.u32 %v1728, 7
        %v1730 = vsub.s32 %v1727, %v1729
        %v1731 = vrot.slane %v1717, %v1730
        %v1732 = vcombine.low %v1452, %v1516
        %v1733 = vcombine.high %v1452, %v1516
        %v1735 = vunpack.c.l.s4 1983009808
        %v1736 = vunpack.c.0.s8 %v1735
        %v1737 = vlaneseq
        %v1738 = vshrl.u32 %v1737, 7
        %v1739 = vsub.s32 %v1736, %v1738
        %v1740 = vrot.slane %v1732, %v1739
        %v1742 = vunpack.c.l.s4 1983009808
        %v1743 = vunpack.c.0.s8 %v1742
        %v1744 = vlaneseq
        %v1745 = vshrl.u32 %v1744, 7
        %v1746 = vsub.s32 %v1743, %v1745
        %v1747 = vrot.slane %v1733, %v1746
        %v1748 = vcombine.low %v1484, %v1548
        %v1749 = vcombine.high %v1484, %v1548
        %v1751 = vunpack.c.l.s4 1983009808
        %v1752 = vunpack.c.0.s8 %v1751
        %v1753 = vlaneseq
        %v1754 = vshrl.u32 %v1753, 7
        %v1755 = vsub.s32 %v1752, %v1754
        %v1756 = vrot.slane %v1748, %v1755
        %v1758 = vunpack.c.l.s4 1983009808
        %v1759 = vunpack.c.0.s8 %v1758
        %v1760 = vlaneseq
        %v1761 = vshrl.u32 %v1760, 7
        %v1762 = vsub.s32 %v1759, %v1761
        %v1763 = vrot.slane %v1749, %v1762
        %v1764 = vcombine.low %v1708, %v1724
        %v1765 = vcombine.high %v1708, %v1724
        %v1767 = vunpack.c.l.s4 1934713408
        %v1768 = vunpack.c.0.s8 %v1767
        %v1769 = vlaneseq
        %v1770 = vshrl.u32 %v1769, 7
        %v1771 = vsub.s32 %v1768, %v1770
        %v1772 = vrot.slane %v1764, %v1771
        %v1774 = vunpack.c.l.s4 1934713408
        %v1775 = vunpack.c.0.s8 %v1774
        %v1776 = vlaneseq
        %v1777 = vshrl.u32 %v1776, 7
        %v1778 = vsub.s32 %v1775, %v1777
        %v1779 = vrot.slane %v1765, %v1778
        %v1780 = vcombine.low %v1715, %v1731
        %v1781 = vcombine.high %v1715, %v1731
        %v1783 = vunpack.c.l.s4 1934713408
        %v1784 = vunpack.c.0.s8 %v1783
        %v1785 = vlaneseq
        %v1786 = vshrl.u32 %v1785, 7
        %v1787 = vsub.s32 %v1784, %v1786
        %v1788 = vrot.slane %v1780, %v1787
        %v1790 = vunpack.c.l.s4 1934713408
        %v1791 = vunpack.c.0.s8 %v1790
        %v1792 = vlaneseq
        %v1793 = vshrl.u32 %v1792, 7
        %v1794 = vsub.s32 %v1791, %v1793
        %v1795 = vrot.slane %v1781, %v1794
        %v1796 = vcombine.low %v1740, %v1756
        %v1797 = vcombine.high %v1740, %v1756
        %v1799 = vunpack.c.l.s4 1934713408
        %v1800 = vunpack.c.0.s8 %v1799
        %v1801 = vlaneseq
        %v1802 = vshrl.u32 %v1801, 7
        %v1803 = vsub.s32 %v1800, %v1802
        %v1804 = vrot.slane %v1796, %v1803
        %v1806 = vunpack.c.l.s4 1934713408
        %v1807 = vunpack.c.0.s8 %v1806
        %v1808 = vlaneseq
        %v1809 = vshrl.u32 %v1808, 7
        %v1810 = vsub.s32 %v1807, %v1809
        %v1811 = vrot.slane %v1797, %v1810
        %v1812 = vcombine.low %v1747, %v1763
        %v1813 = vcombine.high %v1747, %v1763
        %v1815 = vunpack.c.l.s4 1934713408
        %v1816 = vunpack.c.0.s8 %v1815
        %v1817 = vlaneseq
        %v1818 = vshrl.u32 %v1817, 7
        %v1819 = vsub.s32 %v1816, %v1818
        %v1820 = vrot.slane %v1812, %v1819
        %v1822 = vunpack.c.l.s4 1934713408
        %v1823 = vunpack.c.0.s8 %v1822
        %v1824 = vlaneseq
        %v1825 = vshrl.u32 %v1824, 7
        %v1826 = vsub.s32 %v1823, %v1825
        %v1827 = vrot.slane %v1813, %v1826
        %v1828 = vcombine.low %v1772, %v1804
        %v1829 = vcombine.high %v1772, %v1804
        %v1830 = vcombine.low %v1779, %v1811
        %v1831 = vcombine.high %v1779, %v1811
        %v1832 = vcombine.low %v1788, %v1820
        %v1833 = vcombine.high %v1788, %v1820
        %v1834 = vcombine.low %v1795, %v1827
        %v1835 = vcombine.high %v1795, %v1827
        %1836 = vxpose.xlu0.b32.start [1/16] %v1692, 128
        %1837 = vxpose.xlu0.b32.cont [2/16] %v1828, 128
        %1838 = vxpose.xlu0.b32.cont [3/16] 0.0, 128
        %1839 = vxpose.xlu0.b32.cont [4/16] 0.0, 128
        %1840 = vxpose.xlu0.b32.cont [5/16] 0.0, 128
        %1841 = vxpose.xlu0.b32.cont [6/16] 0.0, 128
        %1842 = vxpose.xlu0.b32.cont [7/16] 0.0, 128
        %1843 = vxpose.xlu0.b32.cont [8/16] 0.0, 128
        %1844 = vxpose.xlu0.b32.cont [9/16] 0.0, 128
        %1845 = vxpose.xlu0.b32.cont [10/16] 0.0, 128
        %1846 = vxpose.xlu0.b32.cont [11/16] 0.0, 128
        %1847 = vxpose.xlu0.b32.cont [12/16] 0.0, 128
        %1848 = vxpose.xlu0.b32.cont [13/16] 0.0, 128
        %1849 = vxpose.xlu0.b32.cont [14/16] 0.0, 128
        %1850 = vxpose.xlu0.b32.cont [15/16] 0.0, 128
        %1851 = vxpose.xlu0.b32.end [16/16] 0.0, 128
        %v1852 = vpop.trf.xlu0
        %v1853 = vpop.trf.xlu0
        %v1854 = vpop.trf.xlu0
        %v1855 = vpop.trf.xlu0
        %v1856 = vpop.trf.xlu0
        %v1857 = vpop.trf.xlu0
        %v1858 = vpop.trf.xlu0
        %v1859 = vpop.trf.xlu0
        %v1860 = vpop.trf.xlu0
        %v1861 = vpop.trf.xlu0
        %v1862 = vpop.trf.xlu0
        %v1863 = vpop.trf.xlu0
        %v1864 = vpop.trf.xlu0
        %v1865 = vpop.trf.xlu0
        %v1866 = vpop.trf.xlu0
        %v1867 = vpop.trf.xlu0
        %1868 = vxpose.xlu0.b32.start [1/16] %v1693, 128
        %1869 = vxpose.xlu0.b32.cont [2/16] %v1829, 128
        %1870 = vxpose.xlu0.b32.cont [3/16] 0.0, 128
        %1871 = vxpose.xlu0.b32.cont [4/16] 0.0, 128
        %1872 = vxpose.xlu0.b32.cont [5/16] 0.0, 128
        %1873 = vxpose.xlu0.b32.cont [6/16] 0.0, 128
        %1874 = vxpose.xlu0.b32.cont [7/16] 0.0, 128
        %1875 = vxpose.xlu0.b32.cont [8/16] 0.0, 128
        %1876 = vxpose.xlu0.b32.cont [9/16] 0.0, 128
        %1877 = vxpose.xlu0.b32.cont [10/16] 0.0, 128
        %1878 = vxpose.xlu0.b32.cont [11/16] 0.0, 128
        %1879 = vxpose.xlu0.b32.cont [12/16] 0.0, 128
        %1880 = vxpose.xlu0.b32.cont [13/16] 0.0, 128
        %1881 = vxpose.xlu0.b32.cont [14/16] 0.0, 128
        %1882 = vxpose.xlu0.b32.cont [15/16] 0.0, 128
        %1883 = vxpose.xlu0.b32.end [16/16] 0.0, 128
        %v1884 = vpop.trf.xlu0
        %v1885 = vpop.trf.xlu0
        %v1886 = vpop.trf.xlu0
        %v1887 = vpop.trf.xlu0
        %v1888 = vpop.trf.xlu0
        %v1889 = vpop.trf.xlu0
        %v1890 = vpop.trf.xlu0
        %v1891 = vpop.trf.xlu0
        %v1892 = vpop.trf.xlu0
        %v1893 = vpop.trf.xlu0
        %v1894 = vpop.trf.xlu0
        %v1895 = vpop.trf.xlu0
        %v1896 = vpop.trf.xlu0
        %v1897 = vpop.trf.xlu0
        %v1898 = vpop.trf.xlu0
        %v1899 = vpop.trf.xlu0
        %1900 = vxpose.xlu0.b32.start [1/16] %v1694, 128
        %1901 = vxpose.xlu0.b32.cont [2/16] %v1830, 128
        %1902 = vxpose.xlu0.b32.cont [3/16] 0.0, 128
        %1903 = vxpose.xlu0.b32.cont [4/16] 0.0, 128
        %1904 = vxpose.xlu0.b32.cont [5/16] 0.0, 128
        %1905 = vxpose.xlu0.b32.cont [6/16] 0.0, 128
        %1906 = vxpose.xlu0.b32.cont [7/16] 0.0, 128
        %1907 = vxpose.xlu0.b32.cont [8/16] 0.0, 128
        %1908 = vxpose.xlu0.b32.cont [9/16] 0.0, 128
        %1909 = vxpose.xlu0.b32.cont [10/16] 0.0, 128
        %1910 = vxpose.xlu0.b32.cont [11/16] 0.0, 128
        %1911 = vxpose.xlu0.b32.cont [12/16] 0.0, 128
        %1912 = vxpose.xlu0.b32.cont [13/16] 0.0, 128
        %1913 = vxpose.xlu0.b32.cont [14/16] 0.0, 128
        %1914 = vxpose.xlu0.b32.cont [15/16] 0.0, 128
        %1915 = vxpose.xlu0.b32.end [16/16] 0.0, 128
        %v1916 = vpop.trf.xlu0
        %v1917 = vpop.trf.xlu0
        %v1918 = vpop.trf.xlu0
        %v1919 = vpop.trf.xlu0
        %v1920 = vpop.trf.xlu0
        %v1921 = vpop.trf.xlu0
        %v1922 = vpop.trf.xlu0
        %v1923 = vpop.trf.xlu0
        %v1924 = vpop.trf.xlu0
        %v1925 = vpop.trf.xlu0
        %v1926 = vpop.trf.xlu0
        %v1927 = vpop.trf.xlu0
        %v1928 = vpop.trf.xlu0
        %v1929 = vpop.trf.xlu0
        %v1930 = vpop.trf.xlu0
        %v1931 = vpop.trf.xlu0
        %1932 = vxpose.xlu0.b32.start [1/16] %v1695, 128
        %1933 = vxpose.xlu0.b32.cont [2/16] %v1831, 128
        %1934 = vxpose.xlu0.b32.cont [3/16] 0.0, 128
        %1935 = vxpose.xlu0.b32.cont [4/16] 0.0, 128
        %1936 = vxpose.xlu0.b32.cont [5/16] 0.0, 128
        %1937 = vxpose.xlu0.b32.cont [6/16] 0.0, 128
        %1938 = vxpose.xlu0.b32.cont [7/16] 0.0, 128
        %1939 = vxpose.xlu0.b32.cont [8/16] 0.0, 128
        %1940 = vxpose.xlu0.b32.cont [9/16] 0.0, 128
        %1941 = vxpose.xlu0.b32.cont [10/16] 0.0, 128
        %1942 = vxpose.xlu0.b32.cont [11/16] 0.0, 128
        %1943 = vxpose.xlu0.b32.cont [12/16] 0.0, 128
        %1944 = vxpose.xlu0.b32.cont [13/16] 0.0, 128
        %1945 = vxpose.xlu0.b32.cont [14/16] 0.0, 128
        %1946 = vxpose.xlu0.b32.cont [15/16] 0.0, 128
        %1947 = vxpose.xlu0.b32.end [16/16] 0.0, 128
        %v1948 = vpop.trf.xlu0
        %v1949 = vpop.trf.xlu0
        %v1950 = vpop.trf.xlu0
        %v1951 = vpop.trf.xlu0
        %v1952 = vpop.trf.xlu0
        %v1953 = vpop.trf.xlu0
        %v1954 = vpop.trf.xlu0
        %v1955 = vpop.trf.xlu0
        %v1956 = vpop.trf.xlu0
        %v1957 = vpop.trf.xlu0
        %v1958 = vpop.trf.xlu0
        %v1959 = vpop.trf.xlu0
        %v1960 = vpop.trf.xlu0
        %v1961 = vpop.trf.xlu0
        %v1962 = vpop.trf.xlu0
        %v1963 = vpop.trf.xlu0
        %1964 = vxpose.xlu0.b32.start [1/16] %v1696, 128
        %1965 = vxpose.xlu0.b32.cont [2/16] %v1832, 128
        %1966 = vxpose.xlu0.b32.cont [3/16] 0.0, 128
        %1967 = vxpose.xlu0.b32.cont [4/16] 0.0, 128
        %1968 = vxpose.xlu0.b32.cont [5/16] 0.0, 128
        %1969 = vxpose.xlu0.b32.cont [6/16] 0.0, 128
        %1970 = vxpose.xlu0.b32.cont [7/16] 0.0, 128
        %1971 = vxpose.xlu0.b32.cont [8/16] 0.0, 128
        %1972 = vxpose.xlu0.b32.cont [9/16] 0.0, 128
        %1973 = vxpose.xlu0.b32.cont [10/16] 0.0, 128
        %1974 = vxpose.xlu0.b32.cont [11/16] 0.0, 128
        %1975 = vxpose.xlu0.b32.cont [12/16] 0.0, 128
        %1976 = vxpose.xlu0.b32.cont [13/16] 0.0, 128
        %1977 = vxpose.xlu0.b32.cont [14/16] 0.0, 128
        %1978 = vxpose.xlu0.b32.cont [15/16] 0.0, 128
        %1979 = vxpose.xlu0.b32.end [16/16] 0.0, 128
        %v1980 = vpop.trf.xlu0
        %v1981 = vpop.trf.xlu0
        %v1982 = vpop.trf.xlu0
        %v1983 = vpop.trf.xlu0
        %v1984 = vpop.trf.xlu0
        %v1985 = vpop.trf.xlu0
        %v1986 = vpop.trf.xlu0
        %v1987 = vpop.trf.xlu0
        %v1988 = vpop.trf.xlu0
        %v1989 = vpop.trf.xlu0
        %v1990 = vpop.trf.xlu0
        %v1991 = vpop.trf.xlu0
        %v1992 = vpop.trf.xlu0
        %v1993 = vpop.trf.xlu0
        %v1994 = vpop.trf.xlu0
        %v1995 = vpop.trf.xlu0
        %1996 = vxpose.xlu0.b32.start [1/16] %v1697, 128
        %1997 = vxpose.xlu0.b32.cont [2/16] %v1833, 128
        %1998 = vxpose.xlu0.b32.cont [3/16] 0.0, 128
        %1999 = vxpose.xlu0.b32.cont [4/16] 0.0, 128
        %2000 = vxpose.xlu0.b32.cont [5/16] 0.0, 128
        %2001 = vxpose.xlu0.b32.cont [6/16] 0.0, 128
        %2002 = vxpose.xlu0.b32.cont [7/16] 0.0, 128
        %2003 = vxpose.xlu0.b32.cont [8/16] 0.0, 128
        %2004 = vxpose.xlu0.b32.cont [9/16] 0.0, 128
        %2005 = vxpose.xlu0.b32.cont [10/16] 0.0, 128
        %2006 = vxpose.xlu0.b32.cont [11/16] 0.0, 128
        %2007 = vxpose.xlu0.b32.cont [12/16] 0.0, 128
        %2008 = vxpose.xlu0.b32.cont [13/16] 0.0, 128
        %2009 = vxpose.xlu0.b32.cont [14/16] 0.0, 128
        %2010 = vxpose.xlu0.b32.cont [15/16] 0.0, 128
        %2011 = vxpose.xlu0.b32.end [16/16] 0.0, 128
        %v2012 = vpop.trf.xlu0
        %v2013 = vpop.trf.xlu0
        %v2014 = vpop.trf.xlu0
        %v2015 = vpop.trf.xlu0
        %v2016 = vpop.trf.xlu0
        %v2017 = vpop.trf.xlu0
        %v2018 = vpop.trf.xlu0
        %v2019 = vpop.trf.xlu0
        %v2020 = vpop.trf.xlu0
        %v2021 = vpop.trf.xlu0
        %v2022 = vpop.trf.xlu0
        %v2023 = vpop.trf.xlu0
        %v2024 = vpop.trf.xlu0
        %v2025 = vpop.trf.xlu0
        %v2026 = vpop.trf.xlu0
        %v2027 = vpop.trf.xlu0
        %2028 = vxpose.xlu0.b32.start [1/16] %v1698, 128
        %2029 = vxpose.xlu0.b32.cont [2/16] %v1834, 128
        %2030 = vxpose.xlu0.b32.cont [3/16] 0.0, 128
        %2031 = vxpose.xlu0.b32.cont [4/16] 0.0, 128
        %2032 = vxpose.xlu0.b32.cont [5/16] 0.0, 128
        %2033 = vxpose.xlu0.b32.cont [6/16] 0.0, 128
        %2034 = vxpose.xlu0.b32.cont [7/16] 0.0, 128
        %2035 = vxpose.xlu0.b32.cont [8/16] 0.0, 128
        %2036 = vxpose.xlu0.b32.cont [9/16] 0.0, 128
        %2037 = vxpose.xlu0.b32.cont [10/16] 0.0, 128
        %2038 = vxpose.xlu0.b32.cont [11/16] 0.0, 128
        %2039 = vxpose.xlu0.b32.cont [12/16] 0.0, 128
        %2040 = vxpose.xlu0.b32.cont [13/16] 0.0, 128
        %2041 = vxpose.xlu0.b32.cont [14/16] 0.0, 128
        %2042 = vxpose.xlu0.b32.cont [15/16] 0.0, 128
        %2043 = vxpose.xlu0.b32.end [16/16] 0.0, 128
        %v2044 = vpop.trf.xlu0
        %v2045 = vpop.trf.xlu0
        %v2046 = vpop.trf.xlu0
        %v2047 = vpop.trf.xlu0
        %v2048 = vpop.trf.xlu0
        %v2049 = vpop.trf.xlu0
        %v2050 = vpop.trf.xlu0
        %v2051 = vpop.trf.xlu0
        %v2052 = vpop.trf.xlu0
        %v2053 = vpop.trf.xlu0
        %v2054 = vpop.trf.xlu0
        %v2055 = vpop.trf.xlu0
        %v2056 = vpop.trf.xlu0
        %v2057 = vpop.trf.xlu0
        %v2058 = vpop.trf.xlu0
        %v2059 = vpop.trf.xlu0
        %2060 = vxpose.xlu0.b32.start [1/16] %v1699, 128
        %2061 = vxpose.xlu0.b32.cont [2/16] %v1835, 128
        %2062 = vxpose.xlu0.b32.cont [3/16] 0.0, 128
        %2063 = vxpose.xlu0.b32.cont [4/16] 0.0, 128
        %2064 = vxpose.xlu0.b32.cont [5/16] 0.0, 128
        %2065 = vxpose.xlu0.b32.cont [6/16] 0.0, 128
        %2066 = vxpose.xlu0.b32.cont [7/16] 0.0, 128
        %2067 = vxpose.xlu0.b32.cont [8/16] 0.0, 128
        %2068 = vxpose.xlu0.b32.cont [9/16] 0.0, 128
        %2069 = vxpose.xlu0.b32.cont [10/16] 0.0, 128
        %2070 = vxpose.xlu0.b32.cont [11/16] 0.0, 128
        %2071 = vxpose.xlu0.b32.cont [12/16] 0.0, 128
        %2072 = vxpose.xlu0.b32.cont [13/16] 0.0, 128
        %2073 = vxpose.xlu0.b32.cont [14/16] 0.0, 128
        %2074 = vxpose.xlu0.b32.cont [15/16] 0.0, 128
        %2075 = vxpose.xlu0.b32.end [16/16] 0.0, 128
        %v2076 = vpop.trf.xlu0
        %v2077 = vpop.trf.xlu0
        %v2078 = vpop.trf.xlu0
        %v2079 = vpop.trf.xlu0
        %v2080 = vpop.trf.xlu0
        %v2081 = vpop.trf.xlu0
        %v2082 = vpop.trf.xlu0
        %v2083 = vpop.trf.xlu0
        %v2084 = vpop.trf.xlu0
        %v2085 = vpop.trf.xlu0
        %v2086 = vpop.trf.xlu0
        %v2087 = vpop.trf.xlu0
        %v2088 = vpop.trf.xlu0
        %v2089 = vpop.trf.xlu0
        %v2090 = vpop.trf.xlu0
        %v2091 = vpop.trf.xlu0
        %v2092 = vcombine.low %v1852, %v1916
        %v2094 = vunpack.c.l.s4 1983009808
        %v2095 = vunpack.c.0.s8 %v2094
        %v2096 = vlaneseq
        %v2097 = vshrl.u32 %v2096, 7
        %v2098 = vsub.s32 %v2095, %v2097
        %v2099 = vrot.slane %v2092, %v2098
        %v2100 = vcombine.low %v1884, %v1948
        %v2102 = vunpack.c.l.s4 1983009808
        %v2103 = vunpack.c.0.s8 %v2102
        %v2104 = vlaneseq
        %v2105 = vshrl.u32 %v2104, 7
        %v2106 = vsub.s32 %v2103, %v2105
        %v2107 = vrot.slane %v2100, %v2106
        %v2108 = vcombine.low %v1980, %v2044
        %v2110 = vunpack.c.l.s4 1983009808
        %v2111 = vunpack.c.0.s8 %v2110
        %v2112 = vlaneseq
        %v2113 = vshrl.u32 %v2112, 7
        %v2114 = vsub.s32 %v2111, %v2113
        %v2115 = vrot.slane %v2108, %v2114
        %v2116 = vcombine.low %v2012, %v2076
        %v2118 = vunpack.c.l.s4 1983009808
        %v2119 = vunpack.c.0.s8 %v2118
        %v2120 = vlaneseq
        %v2121 = vshrl.u32 %v2120, 7
        %v2122 = vsub.s32 %v2119, %v2121
        %v2123 = vrot.slane %v2116, %v2122
        %v2124 = vcombine.low %v2099, %v2107
        %v2125 = vcombine.high %v2099, %v2107
        %v2127 = vunpack.c.l.s4 1934713408
        %v2128 = vunpack.c.0.s8 %v2127
        %v2129 = vlaneseq
        %v2130 = vshrl.u32 %v2129, 7
        %v2131 = vsub.s32 %v2128, %v2130
        %v2132 = vrot.slane %v2124, %v2131
        %v2134 = vunpack.c.l.s4 1934713408
        %v2135 = vunpack.c.0.s8 %v2134
        %v2136 = vlaneseq
        %v2137 = vshrl.u32 %v2136, 7
        %v2138 = vsub.s32 %v2135, %v2137
        %v2139 = vrot.slane %v2125, %v2138
        %v2140 = vcombine.low %v2115, %v2123
        %v2141 = vcombine.high %v2115, %v2123
        %v2143 = vunpack.c.l.s4 1934713408
        %v2144 = vunpack.c.0.s8 %v2143
        %v2145 = vlaneseq
        %v2146 = vshrl.u32 %v2145, 7
        %v2147 = vsub.s32 %v2144, %v2146
        %v2148 = vrot.slane %v2140, %v2147
        %v2150 = vunpack.c.l.s4 1934713408
        %v2151 = vunpack.c.0.s8 %v2150
        %v2152 = vlaneseq
        %v2153 = vshrl.u32 %v2152, 7
        %v2154 = vsub.s32 %v2151, %v2153
        %v2155 = vrot.slane %v2141, %v2154
        %v2156 = vcombine.low %v2132, %v2148
        %v2157 = vcombine.high %v2132, %v2148
        %v2158 = vcombine.low %v2139, %v2155
        %v2159 = vcombine.high %v2139, %v2155
        %v2160 = vpack.c.bf16 %v2156, %v2156
        %v2161 = vpack.c.bf16 %v2157, %v2157
        %v2162 = vpack.c.bf16 %v2158, %v2158
        %v2163 = vpack.c.bf16 %v2159, %v2159
        %vm2164 = vcmask 125952
        %2165 = vst.msk [vmem:[%s347] sm:$0xf] %vm2164, %v2160
        %2166 = vst.msk [vmem:[%s347 + $0x4] sm:$0xf] %vm2164, %v2161
        %2167 = vst.msk [vmem:[%s347 + $0x8] sm:$0xf] %vm2164, %v2162
        %2168 = vst.msk [vmem:[%s347 + $0xc] sm:$0xf] %vm2164, %v2163
        %2171 = vrot.lane.b32.xlu0 %v557, 120
        %v2172 = vpop.permute.xlu0 %2171
        %2173 = vrot.lane.b32.xlu0 %v560, 120
        %v2174 = vpop.permute.xlu0 %2173
        %2177 = vrot.lane.b32.xlu0 %v557, 112
        %v2178 = vpop.permute.xlu0 %2177
        %2179 = vrot.lane.b32.xlu0 %v560, 112
        %v2180 = vpop.permute.xlu0 %2179
        %2183 = vrot.lane.b32.xlu0 %v557, 104
        %v2184 = vpop.permute.xlu0 %2183
        %2185 = vrot.lane.b32.xlu0 %v560, 104
        %v2186 = vpop.permute.xlu0 %2185
        %v2189 = vcombine.low %v557, %v2178
        %v2190 = vcombine.high %v557, %v2178
        %v2192 = vunpack.c.l.s4 1983009808
        %v2193 = vunpack.c.0.s8 %v2192
        %v2194 = vlaneseq
        %v2195 = vshrl.u32 %v2194, 7
        %v2196 = vsub.s32 %v2193, %v2195
        %v2197 = vrot.slane %v2189, %v2196
        %v2199 = vunpack.c.l.s4 1983009808
        %v2200 = vunpack.c.0.s8 %v2199
        %v2201 = vlaneseq
        %v2202 = vshrl.u32 %v2201, 7
        %v2203 = vsub.s32 %v2200, %v2202
        %v2204 = vrot.slane %v2190, %v2203
        %v2205 = vcombine.low %v2172, %v2184
        %v2206 = vcombine.high %v2172, %v2184
        %v2208 = vunpack.c.l.s4 1983009808
        %v2209 = vunpack.c.0.s8 %v2208
        %v2210 = vlaneseq
        %v2211 = vshrl.u32 %v2210, 7
        %v2212 = vsub.s32 %v2209, %v2211
        %v2213 = vrot.slane %v2205, %v2212
        %v2215 = vunpack.c.l.s4 1983009808
        %v2216 = vunpack.c.0.s8 %v2215
        %v2217 = vlaneseq
        %v2218 = vshrl.u32 %v2217, 7
        %v2219 = vsub.s32 %v2216, %v2218
        %v2220 = vrot.slane %v2206, %v2219
        %v2221 = vcombine.low %v2197, %v2213
        %v2222 = vcombine.high %v2197, %v2213
        %v2224 = vunpack.c.l.s4 1934713408
        %v2225 = vunpack.c.0.s8 %v2224
        %v2226 = vlaneseq
        %v2227 = vshrl.u32 %v2226, 7
        %v2228 = vsub.s32 %v2225, %v2227
        %v2229 = vrot.slane %v2221, %v2228
        %v2231 = vunpack.c.l.s4 1934713408
        %v2232 = vunpack.c.0.s8 %v2231
        %v2233 = vlaneseq
        %v2234 = vshrl.u32 %v2233, 7
        %v2235 = vsub.s32 %v2232, %v2234
        %v2236 = vrot.slane %v2222, %v2235
        %v2237 = vcombine.low %v2204, %v2220
        %v2238 = vcombine.high %v2204, %v2220
        %v2240 = vunpack.c.l.s4 1934713408
        %v2241 = vunpack.c.0.s8 %v2240
        %v2242 = vlaneseq
        %v2243 = vshrl.u32 %v2242, 7
        %v2244 = vsub.s32 %v2241, %v2243
        %v2245 = vrot.slane %v2237, %v2244
        %v2247 = vunpack.c.l.s4 1934713408
        %v2248 = vunpack.c.0.s8 %v2247
        %v2249 = vlaneseq
        %v2250 = vshrl.u32 %v2249, 7
        %v2251 = vsub.s32 %v2248, %v2250
        %v2252 = vrot.slane %v2238, %v2251
        %v2253 = vcombine.high %v2229, 0.0
        %v2254 = vcombine.high %v2236, 0.0
        %v2255 = vcombine.high %v2245, 0.0
        %v2256 = vcombine.high %v2252, 0.0
        %v2257 = vcombine.low %v560, %v2180
        %v2258 = vcombine.high %v560, %v2180
        %v2260 = vunpack.c.l.s4 1983009808
        %v2261 = vunpack.c.0.s8 %v2260
        %v2262 = vlaneseq
        %v2263 = vshrl.u32 %v2262, 7
        %v2264 = vsub.s32 %v2261, %v2263
        %v2265 = vrot.slane %v2257, %v2264
        %v2267 = vunpack.c.l.s4 1983009808
        %v2268 = vunpack.c.0.s8 %v2267
        %v2269 = vlaneseq
        %v2270 = vshrl.u32 %v2269, 7
        %v2271 = vsub.s32 %v2268, %v2270
        %v2272 = vrot.slane %v2258, %v2271
        %v2273 = vcombine.low %v2174, %v2186
        %v2274 = vcombine.high %v2174, %v2186
        %v2276 = vunpack.c.l.s4 1983009808
        %v2277 = vunpack.c.0.s8 %v2276
        %v2278 = vlaneseq
        %v2279 = vshrl.u32 %v2278, 7
        %v2280 = vsub.s32 %v2277, %v2279
        %v2281 = vrot.slane %v2273, %v2280
        %v2283 = vunpack.c.l.s4 1983009808
        %v2284 = vunpack.c.0.s8 %v2283
        %v2285 = vlaneseq
        %v2286 = vshrl.u32 %v2285, 7
        %v2287 = vsub.s32 %v2284, %v2286
        %v2288 = vrot.slane %v2274, %v2287
        %v2289 = vcombine.low %v2265, %v2281
        %v2290 = vcombine.high %v2265, %v2281
        %v2292 = vunpack.c.l.s4 1934713408
        %v2293 = vunpack.c.0.s8 %v2292
        %v2294 = vlaneseq
        %v2295 = vshrl.u32 %v2294, 7
        %v2296 = vsub.s32 %v2293, %v2295
        %v2297 = vrot.slane %v2289, %v2296
        %v2299 = vunpack.c.l.s4 1934713408
        %v2300 = vunpack.c.0.s8 %v2299
        %v2301 = vlaneseq
        %v2302 = vshrl.u32 %v2301, 7
        %v2303 = vsub.s32 %v2300, %v2302
        %v2304 = vrot.slane %v2290, %v2303
        %v2305 = vcombine.low %v2272, %v2288
        %v2306 = vcombine.high %v2272, %v2288
        %v2308 = vunpack.c.l.s4 1934713408
        %v2309 = vunpack.c.0.s8 %v2308
        %v2310 = vlaneseq
        %v2311 = vshrl.u32 %v2310, 7
        %v2312 = vsub.s32 %v2309, %v2311
        %v2313 = vrot.slane %v2305, %v2312
        %v2315 = vunpack.c.l.s4 1934713408
        %v2316 = vunpack.c.0.s8 %v2315
        %v2317 = vlaneseq
        %v2318 = vshrl.u32 %v2317, 7
        %v2319 = vsub.s32 %v2316, %v2318
        %v2320 = vrot.slane %v2306, %v2319
        %v2321 = vcombine.high %v2297, 0.0
        %v2322 = vcombine.high %v2304, 0.0
        %v2323 = vcombine.high %v2313, 0.0
        %v2324 = vcombine.high %v2320, 0.0
        %v2325 = vcombine.low %v2229, %v2236
        %v2327 = vunpack.c.l.s4 1983009808
        %v2328 = vunpack.c.0.s8 %v2327
        %v2329 = vlaneseq
        %v2330 = vshrl.u32 %v2329, 7
        %v2331 = vsub.s32 %v2328, %v2330
        %v2332 = vrot.slane %v2325, %v2331
        %v2333 = vcombine.low %v2253, %v2254
        %v2335 = vunpack.c.l.s4 1983009808
        %v2336 = vunpack.c.0.s8 %v2335
        %v2337 = vlaneseq
        %v2338 = vshrl.u32 %v2337, 7
        %v2339 = vsub.s32 %v2336, %v2338
        %v2340 = vrot.slane %v2333, %v2339
        %v2341 = vcombine.low %v2245, %v2252
        %v2343 = vunpack.c.l.s4 1983009808
        %v2344 = vunpack.c.0.s8 %v2343
        %v2345 = vlaneseq
        %v2346 = vshrl.u32 %v2345, 7
        %v2347 = vsub.s32 %v2344, %v2346
        %v2348 = vrot.slane %v2341, %v2347
        %v2349 = vcombine.low %v2255, %v2256
        %v2351 = vunpack.c.l.s4 1983009808
        %v2352 = vunpack.c.0.s8 %v2351
        %v2353 = vlaneseq
        %v2354 = vshrl.u32 %v2353, 7
        %v2355 = vsub.s32 %v2352, %v2354
        %v2356 = vrot.slane %v2349, %v2355
        %v2357 = vcombine.low %v2332, %v2340
        %v2358 = vcombine.high %v2332, %v2340
        %v2360 = vunpack.c.l.s4 1934713408
        %v2361 = vunpack.c.0.s8 %v2360
        %v2362 = vlaneseq
        %v2363 = vshrl.u32 %v2362, 7
        %v2364 = vsub.s32 %v2361, %v2363
        %v2365 = vrot.slane %v2357, %v2364
        %v2367 = vunpack.c.l.s4 1934713408
        %v2368 = vunpack.c.0.s8 %v2367
        %v2369 = vlaneseq
        %v2370 = vshrl.u32 %v2369, 7
        %v2371 = vsub.s32 %v2368, %v2370
        %v2372 = vrot.slane %v2358, %v2371
        %v2373 = vcombine.low %v2348, %v2356
        %v2374 = vcombine.high %v2348, %v2356
        %v2376 = vunpack.c.l.s4 1934713408
        %v2377 = vunpack.c.0.s8 %v2376
        %v2378 = vlaneseq
        %v2379 = vshrl.u32 %v2378, 7
        %v2380 = vsub.s32 %v2377, %v2379
        %v2381 = vrot.slane %v2373, %v2380
        %v2383 = vunpack.c.l.s4 1934713408
        %v2384 = vunpack.c.0.s8 %v2383
        %v2385 = vlaneseq
        %v2386 = vshrl.u32 %v2385, 7
        %v2387 = vsub.s32 %v2384, %v2386
        %v2388 = vrot.slane %v2374, %v2387
        %v2389 = vcombine.low %v2365, %v2381
        %v2390 = vcombine.high %v2365, %v2381
        %v2391 = vcombine.low %v2372, %v2388
        %v2392 = vcombine.high %v2372, %v2388
        %v2393 = vcombine.low %v2297, %v2304
        %v2395 = vunpack.c.l.s4 1983009808
        %v2396 = vunpack.c.0.s8 %v2395
        %v2397 = vlaneseq
        %v2398 = vshrl.u32 %v2397, 7
        %v2399 = vsub.s32 %v2396, %v2398
        %v2400 = vrot.slane %v2393, %v2399
        %v2401 = vcombine.low %v2321, %v2322
        %v2403 = vunpack.c.l.s4 1983009808
        %v2404 = vunpack.c.0.s8 %v2403
        %v2405 = vlaneseq
        %v2406 = vshrl.u32 %v2405, 7
        %v2407 = vsub.s32 %v2404, %v2406
        %v2408 = vrot.slane %v2401, %v2407
        %v2409 = vcombine.low %v2313, %v2320
        %v2411 = vunpack.c.l.s4 1983009808
        %v2412 = vunpack.c.0.s8 %v2411
        %v2413 = vlaneseq
        %v2414 = vshrl.u32 %v2413, 7
        %v2415 = vsub.s32 %v2412, %v2414
        %v2416 = vrot.slane %v2409, %v2415
        %v2417 = vcombine.low %v2323, %v2324
        %v2419 = vunpack.c.l.s4 1983009808
        %v2420 = vunpack.c.0.s8 %v2419
        %v2421 = vlaneseq
        %v2422 = vshrl.u32 %v2421, 7
        %v2423 = vsub.s32 %v2420, %v2422
        %v2424 = vrot.slane %v2417, %v2423
        %v2425 = vcombine.low %v2400, %v2408
        %v2426 = vcombine.high %v2400, %v2408
        %v2428 = vunpack.c.l.s4 1934713408
        %v2429 = vunpack.c.0.s8 %v2428
        %v2430 = vlaneseq
        %v2431 = vshrl.u32 %v2430, 7
        %v2432 = vsub.s32 %v2429, %v2431
        %v2433 = vrot.slane %v2425, %v2432
        %v2435 = vunpack.c.l.s4 1934713408
        %v2436 = vunpack.c.0.s8 %v2435
        %v2437 = vlaneseq
        %v2438 = vshrl.u32 %v2437, 7
        %v2439 = vsub.s32 %v2436, %v2438
        %v2440 = vrot.slane %v2426, %v2439
        %v2441 = vcombine.low %v2416, %v2424
        %v2442 = vcombine.high %v2416, %v2424
        %v2444 = vunpack.c.l.s4 1934713408
        %v2445 = vunpack.c.0.s8 %v2444
        %v2446 = vlaneseq
        %v2447 = vshrl.u32 %v2446, 7
        %v2448 = vsub.s32 %v2445, %v2447
        %v2449 = vrot.slane %v2441, %v2448
        %v2451 = vunpack.c.l.s4 1934713408
        %v2452 = vunpack.c.0.s8 %v2451
        %v2453 = vlaneseq
        %v2454 = vshrl.u32 %v2453, 7
        %v2455 = vsub.s32 %v2452, %v2454
        %v2456 = vrot.slane %v2442, %v2455
        %v2457 = vcombine.low %v2433, %v2449
        %v2458 = vcombine.high %v2433, %v2449
        %v2459 = vcombine.low %v2440, %v2456
        %v2460 = vcombine.high %v2440, %v2456
        %v2461 = vpack.c.bf16 %v2457, %v2389
        %v2462 = vpack.c.bf16 %v2458, %v2390
        %v2463 = vpack.c.bf16 %v2459, %v2391
        %v2464 = vpack.c.bf16 %v2460, %v2392
        %v2469 = vunpack.c.l.b16 %v2461
        %v2470 = vunpack.c.h.b16 %v2461
        %v2471 = vunpack.c.l.b16 %v2462
        %v2472 = vunpack.c.h.b16 %v2462
        %v2473 = vunpack.c.l.b16 %v2463
        %v2474 = vunpack.c.h.b16 %v2463
        %v2475 = vunpack.c.l.b16 %v2464
        %v2476 = vunpack.c.h.b16 %v2464
        %v2477 = vpack.c.b16 %v2469, %v2469
        %v2478 = vpack.c.b16 %v2470, %v2470
        %v2479 = vpack.c.b16 %v2471, %v2471
        %v2480 = vpack.c.b16 %v2472, %v2472
        %v2481 = vpack.c.b16 %v2473, %v2473
        %v2482 = vpack.c.b16 %v2474, %v2474
        %v2483 = vpack.c.b16 %v2475, %v2475
        %v2484 = vpack.c.b16 %v2476, %v2476
        %2493 = vst.msk [vmem:[%s378] sm:$0xf] %vm887, %v2477
        %2494 = vst.msk [vmem:[%s378 + $0x4] sm:$0xf] %vm887, %v2478
        %2495 = vst.msk [vmem:[%s378 + $0x8] sm:$0xf] %vm887, %v2479
        %2496 = vst.msk [vmem:[%s378 + $0xc] sm:$0xf] %vm887, %v2480
        %2497 = vst.msk [vmem:[%s378 + $0x10] sm:$0xf] %vm887, %v2481
        %2498 = vst.msk [vmem:[%s378 + $0x14] sm:$0xf] %vm887, %v2482
        %2499 = vst.msk [vmem:[%s378 + $0x18] sm:$0xf] %vm887, %v2483
        %2500 = vst.msk [vmem:[%s378 + $0x1c] sm:$0xf] %vm887, %v2484
        %s2501 = smul.u32 2, %s31
        %p2502 = scmp.lt.s32.totalorder %s30, 1
        %s2503 = scalar_select %p2502, %s30, 1
        %p2504 = scmp.lt.s32.totalorder %s2501, 1
        %s2505 = scalar_select %p2504, %s2501, 1
        %s2506 = smul.addr %s2503, 8
        %s2507 = sadd.s32 %s2505, %s2506
        %s2508 = smul.addr %s2507, 4
        %s2509 = scalar_lea.vmem %s4, %s2508
        %s2510 = sand.u32 %s167, 1
        %s2511 = scalar_lea.sflag [#allocation4], %s2510
        %s2512 = sand.u32 %s167, 1
        %s2513 = smul.addr %s2512, 16
        %s2514 = scalar_lea.vmem [#allocation10], %s2513
        %s2515 = smul.u32 2, %s31
        %p2516 = scmp.lt.s32.totalorder %s30, 1
        %s2517 = scalar_select %p2516, %s30, 1
        %p2518 = scmp.lt.s32.totalorder %s2515, 1
        %s2519 = scalar_select %p2518, %s2515, 1
        %s2520 = smul.addr %s2517, 8
        %s2521 = sadd.s32 %s2519, %s2520
        %s2522 = smul.addr %s2521, 4
        %s2523 = scalar_lea.vmem %s6, %s2522
        // Predicated region
        $region53: #{tpu_custom_call.1} parent=35 // pred_check
          %p2524 = pneg %p149
        $region54: #{tpu_custom_call.1} parent=35 // pred_check_branch
          %2526 = sbr.rel (%p2524) target = $region56
        $region55: #{tpu_custom_call.1} parent=35 // pred_region
          %s2527 = smul.u32 2, %s31
        $region56: #{tpu_custom_call.1} parent=35 // pred_fallthru
          _
        // Predicated region
        $region57: #{tpu_custom_call.1} parent=35 // pred_check
          %p2528 = pneg %p177
        $region58: #{tpu_custom_call.1} parent=35 // pred_check_branch
          %2530 = sbr.rel (%p2528) target = $region60
        $region59: #{tpu_custom_call.1} parent=35 // pred_region
          %s2532 = ssub.s32 256, 256
          %2533 = vsyncadd %s2511, %s2532
          %s2534 = smul.addr %s30, 4
          %s2535 = sadd.s32 %s31, %s2534
          %s2536 = smul.addr %s2535, 64
          %s2537 = scalar_lea.hbm %s5, %s2536
          %s2538 = sshll.u32 %s2514, 4
          %s2539 = int_to_ptr.vmem [resolvable:$true] %s2538
          %2544 = dma.vmem_to_hbm [thread:$0]  %s2539, 256, %s2537, %s2511, 64, 64, 4
        $region60: #{tpu_custom_call.1} parent=35 // pred_fallthru
          _
        // Predicated region
        $region61: #{tpu_custom_call.1} parent=35 // pred_check
          %p2545 = pneg %p205
        $region62: #{tpu_custom_call.1} parent=35 // pred_check_branch
          %2547 = sbr.rel (%p2545) target = $region64
        $region63: #{tpu_custom_call.1} parent=35 // pred_region
          %s2548 = smul.u32 2, %s31
        $region64: #{tpu_custom_call.1} parent=35 // pred_fallthru
          _
      $region36: #{tpu_custom_call.1} parent=5 // pred_fallthru
        _
      %p2549 = scmp.le.s32.totalorder 2, %s21
      // Predicated region
      $region65: #{tpu_custom_call.1} parent=5 // pred_check
        %p2550 = pneg %p2549
      $region66: #{tpu_custom_call.1} parent=5 // pred_check_branch
        %2552 = sbr.rel (%p2550) target = $region68
      $region67: #{tpu_custom_call.1} parent=5 // pred_region
        %s2553 = ssub.s32 %s21, 2
        // Predicated region
        $region69: #{tpu_custom_call.1} parent=67 // pred_check
          %p2554 = pneg %p155
        $region70: #{tpu_custom_call.1} parent=67 // pred_check_branch
          %2556 = sbr.rel (%p2554) target = $region72
        $region71: #{tpu_custom_call.1} parent=67 // pred_region
          %s2557 = smul.u32 2, %s33
          %p2558 = scmp.lt.s32.totalorder %s32, 1
          %s2559 = scalar_select %p2558, %s32, 1
          %p2560 = scmp.lt.s32.totalorder %s2557, 1
          %s2561 = scalar_select %p2560, %s2557, 1
          %s2562 = smul.addr %s2559, 8
          %s2563 = sadd.s32 %s2561, %s2562
          %s2564 = smul.addr %s2563, 4
          %s2565 = scalar_lea.vmem %s4, %s2564
        $region72: #{tpu_custom_call.1} parent=67 // pred_fallthru
          _
        // Predicated region
        $region73: #{tpu_custom_call.1} parent=67 // pred_check
          %p2566 = pneg %p183
        $region74: #{tpu_custom_call.1} parent=67 // pred_check_branch
          %2568 = sbr.rel (%p2566) target = $region76
        $region75: #{tpu_custom_call.1} parent=67 // pred_region
          %s2569 = sand.u32 %s168, 1
          %s2570 = scalar_lea.sflag [#allocation4], %s2569
          %s2571 = sand.u32 %s168, 1
          %s2572 = smul.addr %s2571, 16
          %s2573 = scalar_lea.vmem [#allocation10], %s2572
          %2574 = dma.done %s2570, 256
        $region76: #{tpu_custom_call.1} parent=67 // pred_fallthru
          _
        // Predicated region
        $region77: #{tpu_custom_call.1} parent=67 // pred_check
          %p2575 = pneg %p211
        $region78: #{tpu_custom_call.1} parent=67 // pred_check_branch
          %2577 = sbr.rel (%p2575) target = $region80
        $region79: #{tpu_custom_call.1} parent=67 // pred_region
          %s2578 = smul.u32 2, %s33
          %p2579 = scmp.lt.s32.totalorder %s32, 1
          %s2580 = scalar_select %p2579, %s32, 1
          %p2581 = scmp.lt.s32.totalorder %s2578, 1
          %s2582 = scalar_select %p2581, %s2578, 1
          %s2583 = smul.addr %s2580, 8
          %s2584 = sadd.s32 %s2582, %s2583
          %s2585 = smul.addr %s2584, 4
          %s2586 = scalar_lea.vmem %s6, %s2585
        $region80: #{tpu_custom_call.1} parent=67 // pred_fallthru
          _
      $region68: #{tpu_custom_call.1} parent=5 // pred_fallthru
        _
    $region6: #{tpu_custom_call.1} parent=1 // loop_footer
      %s25 = sadd.s32 1, %s21
    $region7: #{tpu_custom_call.1} parent=1 // loop_footer_branch
      %20 = sbr.rel target = $region3
    $region8: #{tpu_custom_call.1} parent=1 // loop_exit
      _
    %2587 = vsyncpa [#allocation3], 1
    %s2588 = scalar_lea.sflag [#allocation3], 1
    %2589 = vsyncpa %s2588, 1
    %2590 = vsyncpa [#allocation6], 1
    %2591 = vsyncpa [#allocation9], 1
    %2592 = vsyncpa [#allocation4], 1
    %s2593 = scalar_lea.sflag [#allocation4], 1
    %2594 = vsyncpa %s2593, 1

</llo_original>
